<compile_context>
chip_gen: v6e
topology: v6e:2x2x1
jax: 0.10.0
libtpu: 0.0.40
codegen_flags: <defaults>
</compile_context>

<pallas_src>
import numpy as np
import jax
import jax.numpy as jnp
from jax.experimental import pallas as pl
from jax.experimental.pallas import tpu as pltpu

EOS_ID = 2
SOS_ID = 1
MAX_LENGTH = 16


# ----------------------------------------------------------------------------
# Fused kernel: embedding(+folded input proj) + user-init + GRU + attention +
# pointer scatter + log.
# ----------------------------------------------------------------------------
def _decoder_fused_kernel(
    tgt_ref, src_ref, enc_ref, user_ref,
    slab3h_ref, slabh_ref, slabv_ref,
    logit_ref, attn_ref, attout_ref, hlast_ref, h0_ref,
):
    TB = tgt_ref.shape[0]                 # T*B rows, time-major
    B, S, H = enc_ref.shape
    T = TB // B
    U = user_ref.shape[1]
    V = slab3h_ref.shape[0] - H - 2
    f32 = jnp.float32

    # ---- unpack parameter slabs (static, mostly 8-aligned sublane slices) ----
    emb_wih = slab3h_ref[0:V, :]                          # (V, 3H) = emb @ W_ih^T (folded)
    w_hh    = slab3h_ref[V:V + H, :]                      # (H, 3H)
    b_ih    = slab3h_ref[V + H:V + H + 1, :]              # (1, 3H)
    b_hh    = slab3h_ref[V + H + 1:V + H + 2, :]          # (1, 3H)

    w_lo = slabh_ref[0:2 * H, :]                          # (2H, H) = [W_mix^T ; W_dec^T]
    w_tr = slabh_ref[2 * H:2 * H + U, :]                  # (U, H)
    b_tr = slabh_ref[2 * H + U:2 * H + U + 1, :]          # (1, H)
    b_lo = slabh_ref[2 * H + U + 1:2 * H + U + 2, :]      # (1, H)

    w_out_pg = slabv_ref[0:H, :]                          # (H, V+1) = [W_out^T | w_pg]
    b_out_pg = slabv_ref[H:H + 1, :]                      # (1, V+1) = [b_out | b_pg]

    # ---- _user_init_state: h0 = relu(user @ W_tr + b_tr) ----
    h0 = jnp.maximum(
        jnp.dot(user_ref[...], w_tr, preferred_element_type=f32) + b_tr, 0.0)
    h0_ref[...] = h0

    # ---- embedding lookup + input projection folded into one matmul ----
    # emb[tgt] @ W_ih == one_hot(tgt) @ (emb @ W_ih); rows are time-major (t*B + b).
    # TODO(synk): nn.Dropout(0.2) omitted (deterministic / eval mode).
    tgt = tgt_ref[...]                                                    # (T*B, 1) int32
    onehot = (tgt == jax.lax.broadcasted_iota(jnp.int32, (TB, V), 1)).astype(f32)
    gx_all = jnp.dot(onehot, emb_wih, preferred_element_type=f32) + b_ih  # (T*B, 3H)

    # ---- GRU recurrence (torch gate order [r; z; n]); hiddens kept as SSA values ----
    h = h0
    hs = []
    for t in range(T):  # T small & static; fully unrolled, static indices everywhere
        gx = gx_all[t * B:(t + 1) * B, :]                                 # contiguous slice
        gh = jnp.dot(h, w_hh, preferred_element_type=f32) + b_hh          # (B, 3H)
        rz = jax.nn.sigmoid(gx[:, 0:2 * H] + gh[:, 0:2 * H])              # one EUP pass for r,z
        r = rz[:, 0:H]
        z = rz[:, H:2 * H]
        n = jnp.tanh(gx[:, 2 * H:] + r * gh[:, 2 * H:])
        h = (1.0 - z) * n + z * h
        hs.append(h)
    hlast_ref[...] = h
    dec = jnp.stack(hs, axis=1)                                           # (B, T, H)

    # ---- Luong attention: attn = softmax(dec @ enc^T); mix = attn @ enc ----
    enc = enc_ref[...]                                                    # (B, S, H)
    scores = jnp.einsum("bth,bsh->bts", dec, enc, preferred_element_type=f32)
    attn = jax.nn.softmax(scores, axis=-1)                                # (B, T, S)
    mix = jnp.einsum("bts,bsh->bth", attn, enc, preferred_element_type=f32)

    # ---- fused per-row projections ----
    dec2 = dec.reshape(B * T, H)
    mix2 = mix.reshape(B * T, H)
    att_out = jnp.tanh(
        jnp.dot(jnp.concatenate([mix2, dec2], axis=1), w_lo,
                preferred_element_type=f32) + b_lo)                       # (B*T, H)

    lpg = jnp.dot(att_out, w_out_pg, preferred_element_type=f32) + b_out_pg   # (B*T, V+1)
    psm = jax.nn.softmax(lpg[:, 0:V], axis=-1)                            # (B*T, V)
    p_gen = jax.nn.sigmoid(lpg[:, V:V + 1])                               # (B*T, 1)

    vocab_dist = p_gen * psm                                              # (B*T, V)
    attn_w = (1.0 - p_gen).reshape(B, T, 1) * attn                        # (B, T, S)

    # Pointer: scatter_add over vocab axis via one-hot(src) matmul (duplicates accumulate).
    src = src_ref[...]                                                    # (B, S) int32
    src_oh = (src[:, :, None] ==
              jax.lax.broadcasted_iota(jnp.int32, (B, S, V), 2)).astype(f32)
    scat = jnp.einsum("bts,bsv->btv", attn_w, src_oh,
                      preferred_element_type=f32).reshape(B * T, V)

    # Parity with the module: torch.log without epsilon.
    logit_ref[...] = jnp.log(vocab_dist + scat)
    attn_ref[...] = attn.reshape(B * T, S)
    attout_ref[...] = att_out


def decoder_fused_pallas(tgt_tm, src, enc, user_b, slab_3h, slab_h, slab_v):
    TB = tgt_tm.shape[0]
    B, S, H = enc.shape
    T = TB // B
    U = user_b.shape[1]
    V = slab_3h.shape[0] - H - 2

    out_shape = (
        jax.ShapeDtypeStruct((B * T, V), jnp.float32),   # logit (flat b-major rows)
        jax.ShapeDtypeStruct((B * T, S), jnp.float32),   # attn
        jax.ShapeDtypeStruct((B * T, H), jnp.float32),   # attention output
        jax.ShapeDtypeStruct((B, H), jnp.float32),       # final hidden
        jax.ShapeDtypeStruct((B, H), jnp.float32),       # initial hidden (user init)
    )
    grid_spec = pltpu.PrefetchScalarGridSpec(
        num_scalar_prefetch=0,
        grid=(1,),
        in_specs=[
            pl.BlockSpec((TB, 1), lambda i: (0, 0)),                 # tgt ids (time-major)
            pl.BlockSpec((B, S), lambda i: (0, 0)),                  # src ids
            pl.BlockSpec((B, S, H), lambda i: (0, 0, 0)),            # encoder outputs
            pl.BlockSpec((B, U), lambda i: (0, 0)),                  # user embedding
            pl.BlockSpec(slab_3h.shape, lambda i: (0, 0)),           # [emb@Wih; Whh; b_ih; b_hh]
            pl.BlockSpec(slab_h.shape, lambda i: (0, 0)),            # [Wlo; Wtr; b_tr; b_lo]
            pl.BlockSpec(slab_v.shape, lambda i: (0, 0)),            # [Wout|wpg ; b_out|b_pg]
        ],
        out_specs=(
            pl.BlockSpec((B * T, V), lambda i: (0, 0)),
            pl.BlockSpec((B * T, S), lambda i: (0, 0)),
            pl.BlockSpec((B * T, H), lambda i: (0, 0)),
            pl.BlockSpec((B, H), lambda i: (0, 0)),
            pl.BlockSpec((B, H), lambda i: (0, 0)),
        ),
    )
    return pl.pallas_call(
        _decoder_fused_kernel,
        out_shape=out_shape,
        grid_spec=grid_spec,
        compiler_params=pltpu.CompilerParams(dimension_semantics=("arbitrary",)),
    )(tgt_tm, src, enc, user_b, slab_3h, slab_h, slab_v)


# ----------------------------------------------------------------------------
# Parameter packing (offline) and module wrapper (forward_step + forward).
# ----------------------------------------------------------------------------
def prepare_decoder_params(p):
    """Fold emb @ W_ih and pack all weights/biases into 3 lane-width-grouped slabs."""
    f32 = jnp.float32
    emb_wih = jnp.dot(p["emb"].astype(f32), p["w_ih_t"].astype(f32))      # (V, 3H)
    slab_3h = jnp.concatenate([emb_wih, p["w_hh_t"], p["b_ih"], p["b_hh"]], axis=0)
    w_lo = jnp.concatenate([p["w_lo_mix_t"], p["w_lo_dec_t"]], axis=0)    # (2H, H)
    slab_h = jnp.concatenate([w_lo, p["w_tr_t"], p["b_tr"], p["b_lo"]], axis=0)
    w_out_pg = jnp.concatenate([p["w_out_t"], p["w_pg"]], axis=1)         # (H, V+1)
    b_out_pg = jnp.concatenate([p["b_out"], p["b_pg"]], axis=1)           # (1, V+1)
    slab_v = jnp.concatenate([w_out_pg, b_out_pg], axis=0)                # (H+1, V+1)
    return dict(slab_3h=slab_3h.astype(f32), slab_h=slab_h.astype(f32),
                slab_v=slab_v.astype(f32))


def decoder_p_forward_step(prep, tgt_input, src, encoder_outputs, user_embedding_b):
    """Mirrors Decoder_P.forward_step. Returns (logit, hidden, attn, output, hidden_init)."""
    B, T = tgt_input.shape
    S = src.shape[1]
    H = encoder_outputs.shape[-1]
    V = prep["slab_3h"].shape[0] - H - 2

    # Time-major ids so per-step gx slices inside the kernel are contiguous.
    tgt_tm = jnp.transpose(tgt_input.astype(jnp.int32)).reshape(T * B, 1)

    logit2d, attn2d, attout2d, h_last, h0 = decoder_fused_pallas(
        tgt_tm, src.astype(jnp.int32),
        encoder_outputs.astype(jnp.float32), user_embedding_b.astype(jnp.float32),
        prep["slab_3h"], prep["slab_h"], prep["slab_v"])

    logit = logit2d.reshape(B, T, V)      # pure leading-dim splits (free in XLA)
    attn = attn2d.reshape(B, T, S)
    att_out = attout2d.reshape(B, T, H)
    hidden = h_last[None]                 # (num_layers=1, B, H)
    hidden_init = h0[None]
    return logit, hidden, attn, att_out, hidden_init


@jax.jit
def _device_forward(prep, tgt_input, src, encoder_outputs, user_embedding_b):
    logit, hidden, attn, att_out, hidden_init = decoder_p_forward_step(
        prep, tgt_input, src, encoder_outputs, user_embedding_b)
    # On-device argmax symbols and first-EOS lengths (no per-timestep host syncs).
    symbols = jnp.argmax(logit, axis=-1).astype(jnp.int32)       # (B, T)
    eos_hit = symbols == EOS_ID
    lengths = jnp.where(jnp.any(eos_hit, axis=1),
                        jnp.argmax(eos_hit, axis=1).astype(jnp.int32) + 1,
                        MAX_LENGTH)
    return logit, hidden, attn, att_out, hidden_init, symbols, lengths


def decoder_p_forward(prep, tgt_input, src, encoder_outputs, user_embedding,
                      teacher_forcing_ratio=1.0):
    B, T = tgt_input.shape
    H = encoder_outputs.shape[-1]
    if user_embedding.ndim == 1:
        user_embedding = jnp.broadcast_to(user_embedding, (B, user_embedding.shape[0]))

    # teacher_forcing_ratio == 1 -> teacher-forcing branch (random.random() < 1).
    # TODO(synk): non-teacher-forcing (greedy feedback) branch not implemented.
    (logit, hidden, attn, att_out, hidden_init, symbols, lengths_dev) = _device_forward(
        prep, tgt_input, src, encoder_outputs, user_embedding)

    decoder_outputs = [logit[:, di, :] for di in range(T)]
    sequence_symbols = [symbols[:, di:di + 1] for di in range(T)]
    lengths = np.asarray(lengths_dev).astype(np.int64)            # single device->host copy

    states = jnp.zeros((B, MAX_LENGTH, H), jnp.float32)  # untouched in teacher-forcing path
    return decoder_outputs, hidden_init, hidden, sequence_symbols, lengths, states, logit, attn


# ----------------------------------------------------------------------------
# Parameters & pure-JAX reference.
# ----------------------------------------------------------------------------
def init_params(key, V, E, H, U):
    ks = jax.random.split(key, 14)
    n = lambda k, s: (0.1 * jax.random.normal(k, s)).astype(jnp.float32)
    return dict(
        emb=n(ks[0], (V, E)),
        w_ih_t=n(ks[1], (E, 3 * H)), w_hh_t=n(ks[2], (H, 3 * H)),
        b_ih=n(ks[3], (1, 3 * H)), b_hh=n(ks[4], (1, 3 * H)),
        w_tr_t=n(ks[5], (U, H)), b_tr=n(ks[6], (1, H)),
        w_lo_mix_t=n(ks[7], (H, H)), w_lo_dec_t=n(ks[8], (H, H)), b_lo=n(ks[9], (1, H)),
        w_out_t=n(ks[10], (H, V)), b_out=n(ks[11], (1, V)),
        w_pg=n(ks[12], (H, 1)), b_pg=n(ks[13], (1, 1)),
    )


def reference_forward_step(p, tgt_input, src, enc_out, user_emb_b):
    emb = p["emb"][tgt_input]
    h = jax.nn.relu(user_emb_b @ p["w_tr_t"] + p["b_tr"])
    H = h.shape[-1]
    outs = []
    for t in range(emb.shape[1]):
        x = emb[:, t, :]
        gx = x @ p["w_ih_t"] + p["b_ih"]
        gh = h @ p["w_hh_t"] + p["b_hh"]
        r = jax.nn.sigmoid(gx[:, :H] + gh[:, :H])
        z = jax.nn.sigmoid(gx[:, H:2 * H] + gh[:, H:2 * H])
        n = jnp.tanh(gx[:, 2 * H:] + r * gh[:, 2 * H:])
        h = (1.0 - z) * n + z * h
        outs.append(h)
    dec = jnp.stack(outs, axis=1)
    scores = jnp.einsum("bth,bsh->bts", dec, enc_out)
    attn = jax.nn.softmax(scores, axis=-1)
    mix = jnp.einsum("bts,bsh->bth", attn, enc_out)
    att_out = jnp.tanh(mix @ p["w_lo_mix_t"] + dec @ p["w_lo_dec_t"] + p["b_lo"])
    psm = jax.nn.softmax(att_out @ p["w_out_t"] + p["b_out"], axis=-1)
    p_gen = jax.nn.sigmoid(att_out @ p["w_pg"] + p["b_pg"])
    vocab_dist = p_gen * psm
    attn_w = (1.0 - p_gen) * attn
    onehot = jax.nn.one_hot(src, psm.shape[-1], dtype=jnp.float32)
    scat = jnp.einsum("bts,bsv->btv", attn_w, onehot)
    return jnp.log(vocab_dist + scat), attn


# ----------------------------------------------------------------------------
if __name__ == "__main__":
    B, T, S = 2, 8, 8
    H = 32          # hidden_dim arg 16 * 2
    E = 300         # embedding dim (fixed by nn.GRU(300, ...))
    U = 24          # user_size
    V = 64          # vocab_size

    key = jax.random.PRNGKey(0)
    kp, k1, k2, k3, k4 = jax.random.split(key, 5)
    params = init_params(kp, V, E, H, U)
    prep = prepare_decoder_params(params)   # offline fold + pack (once)

    tgt_input = jax.random.randint(k1, (B, T), 0, V, dtype=jnp.int32)
    src = jax.random.randint(k2, (B, S), 0, V, dtype=jnp.int32)
    encoder_outputs = jax.random.normal(k3, (B, S, H), dtype=jnp.float32)
    user_embedding = jax.random.normal(k4, (U,), dtype=jnp.float32)  # 1-D, exercises expand

    outs = decoder_p_forward(prep, tgt_input, src, encoder_outputs, user_embedding,
                             teacher_forcing_ratio=1.0)
    (decoder_outputs, hidden_init, hidden, sequence_symbols, lengths, states,
     logit, attn) = outs
    jax.block_until_ready(logit)

    # Correctness check against a pure-JAX reference of forward_step.
    user_b = jnp.broadcast_to(user_embedding, (B, U))
    ref_logit, ref_attn = reference_forward_step(params, tgt_input, src,
                                                 encoder_outputs, user_b)
    np.testing.assert_allclose(np.asarray(logit), np.asarray(ref_logit),
                               rtol=2e-2, atol=2e-2)
    np.testing.assert_allclose(np.asarray(attn), np.asarray(ref_attn),
                               rtol=2e-2, atol=2e-2)
    assert np.all(np.isfinite(np.asarray(logit)))
    assert len(decoder_outputs) == T and states.shape == (B, MAX_LENGTH, H)
    assert hidden.shape == (1, B, H) and hidden_init.shape == (1, B, H)
    assert lengths.shape == (B,)

    print("KERNEL_OK")
</pallas_src>

<mosaic_0001>
module attributes {stable_mosaic.version = 11 : i64} {
  func.func @_decoder_fused_kernel(%arg0: i32, %arg1: memref<16x1xi32, #tpu.memory_space<vmem>>, %arg2: memref<2x8xi32, #tpu.memory_space<vmem>>, %arg3: memref<2x8x32xf32, #tpu.memory_space<vmem>>, %arg4: memref<2x24xf32, #tpu.memory_space<vmem>>, %arg5: memref<98x96xf32, #tpu.memory_space<vmem>>, %arg6: memref<90x32xf32, #tpu.memory_space<vmem>>, %arg7: memref<33x65xf32, #tpu.memory_space<vmem>>, %arg8: memref<16x64xf32, #tpu.memory_space<vmem>>, %arg9: memref<16x8xf32, #tpu.memory_space<vmem>>, %arg10: memref<16x32xf32, #tpu.memory_space<vmem>>, %arg11: memref<2x32xf32, #tpu.memory_space<vmem>>, %arg12: memref<2x32xf32, #tpu.memory_space<vmem>>) attributes {dimension_semantics = [#tpu.dimension_semantics<arbitrary>], iteration_bounds = array<i64: 1>, scalar_prefetch = 0 : i64, scratch_operands = 0 : i64, tpu.core_type = #tpu.core_type<tc>, window_params = [{pipeline_mode = #tpu.pipeline_mode<synchronous>, transform_indices = @transform_0, window_bounds = array<i64: 16, 1>}, {pipeline_mode = #tpu.pipeline_mode<synchronous>, transform_indices = @transform_1, window_bounds = array<i64: 2, 8>}, {pipeline_mode = #tpu.pipeline_mode<synchronous>, transform_indices = @transform_2, window_bounds = array<i64: 2, 8, 32>}, {pipeline_mode = #tpu.pipeline_mode<synchronous>, transform_indices = @transform_3, window_bounds = array<i64: 2, 24>}, {pipeline_mode = #tpu.pipeline_mode<synchronous>, transform_indices = @transform_4, window_bounds = array<i64: 98, 96>}, {pipeline_mode = #tpu.pipeline_mode<synchronous>, transform_indices = @transform_5, window_bounds = array<i64: 90, 32>}, {pipeline_mode = #tpu.pipeline_mode<synchronous>, transform_indices = @transform_6, window_bounds = array<i64: 33, 65>}, {pipeline_mode = #tpu.pipeline_mode<synchronous>, transform_indices = @transform_7, window_bounds = array<i64: 16, 64>}, {pipeline_mode = #tpu.pipeline_mode<synchronous>, transform_indices = @transform_8, window_bounds = array<i64: 16, 8>}, {pipeline_mode = #tpu.pipeline_mode<synchronous>, transform_indices = @transform_9, window_bounds = array<i64: 16, 32>}, {pipeline_mode = #tpu.pipeline_mode<synchronous>, transform_indices = @transform_10, window_bounds = array<i64: 2, 32>}, {pipeline_mode = #tpu.pipeline_mode<synchronous>, transform_indices = @transform_11, window_bounds = array<i64: 2, 32>}]} {
    %c0 = arith.constant 0 : index
    %c0_0 = arith.constant 0 : index
    %0 = vector.load %arg5[%c0, %c0_0] : memref<98x96xf32, #tpu.memory_space<vmem>>, vector<64x96xf32>
    %c64 = arith.constant 64 : index
    %c0_1 = arith.constant 0 : index
    %1 = vector.load %arg5[%c64, %c0_1] : memref<98x96xf32, #tpu.memory_space<vmem>>, vector<32x96xf32>
    %c96 = arith.constant 96 : index
    %c0_2 = arith.constant 0 : index
    %2 = vector.load %arg5[%c96, %c0_2] : memref<98x96xf32, #tpu.memory_space<vmem>>, vector<1x96xf32>
    %c97 = arith.constant 97 : index
    %c0_3 = arith.constant 0 : index
    %3 = vector.load %arg5[%c97, %c0_3] : memref<98x96xf32, #tpu.memory_space<vmem>>, vector<1x96xf32>
    %c0_4 = arith.constant 0 : index
    %c0_5 = arith.constant 0 : index
    %4 = vector.load %arg6[%c0_4, %c0_5] : memref<90x32xf32, #tpu.memory_space<vmem>>, vector<64x32xf32>
    %c64_6 = arith.constant 64 : index
    %c0_7 = arith.constant 0 : index
    %5 = vector.load %arg6[%c64_6, %c0_7] : memref<90x32xf32, #tpu.memory_space<vmem>>, vector<24x32xf32>
    %c88 = arith.constant 88 : index
    %c0_8 = arith.constant 0 : index
    %6 = vector.load %arg6[%c88, %c0_8] : memref<90x32xf32, #tpu.memory_space<vmem>>, vector<1x32xf32>
    %c89 = arith.constant 89 : index
    %c0_9 = arith.constant 0 : index
    %7 = vector.load %arg6[%c89, %c0_9] : memref<90x32xf32, #tpu.memory_space<vmem>>, vector<1x32xf32>
    %c0_10 = arith.constant 0 : index
    %c0_11 = arith.constant 0 : index
    %8 = vector.load %arg7[%c0_10, %c0_11] : memref<33x65xf32, #tpu.memory_space<vmem>>, vector<32x65xf32>
    %c32 = arith.constant 32 : index
    %c0_12 = arith.constant 0 : index
    %9 = vector.load %arg7[%c32, %c0_12] : memref<33x65xf32, #tpu.memory_space<vmem>>, vector<1x65xf32>
    %c0_13 = arith.constant 0 : index
    %c0_14 = arith.constant 0 : index
    %10 = vector.load %arg4[%c0_13, %c0_14] : memref<2x24xf32, #tpu.memory_space<vmem>>, vector<2x24xf32>
    %cst = arith.constant dense<0.000000e+00> : vector<2x32xf32>
    %11 = tpu.matmul %10, %5, %cst {dimension_numbers = #tpu.dot_dimension_numbers<[1], [0], [0], [1], [0, 0, 1, 1], [], []>} : vector<2x24xf32>, vector<24x32xf32>, vector<2x32xf32> -> vector<2x32xf32>
    %12 = vector.broadcast %6 : vector<1x32xf32> to vector<2x32xf32>
    %13 = arith.addf %11, %12 : vector<2x32xf32>
    %cst_15 = arith.constant 0.000000e+00 : f32
    %14 = vector.broadcast %cst_15 : f32 to vector<2x32xf32>
    %15 = arith.maximumf %13, %14 : vector<2x32xf32>
    %c0_16 = arith.constant 0 : index
    %c0_17 = arith.constant 0 : index
    %16 = vector.load %arg12[%c0_16, %c0_17] : memref<2x32xf32, #tpu.memory_space<vmem>>, vector<2x32xf32>
    tpu.vector_store %arg12[%c0_16, %c0_17], %15 {strides = array<i32>} : memref<2x32xf32, #tpu.memory_space<vmem>>, vector<2x32xf32>,
    %c0_18 = arith.constant 0 : index
    %c0_19 = arith.constant 0 : index
    %17 = vector.load %arg1[%c0_18, %c0_19] : memref<16x1xi32, #tpu.memory_space<vmem>>, vector<16x1xi32>
    %18 = tpu.iota {dimensions = array<i32: 1>} : vector<16x64xi32>
    %19 = vector.broadcast %17 : vector<16x1xi32> to vector<16x64xi32>
    %20 = arith.cmpi eq, %19, %18 : vector<16x64xi32>
    %21 = arith.extui %20 : vector<16x64xi1> to vector<16x64xi32>
    %22 = arith.sitofp %21 : vector<16x64xi32> to vector<16x64xf32>
    %cst_20 = arith.constant dense<0.000000e+00> : vector<16x96xf32>
    %23 = tpu.matmul %22, %0, %cst_20 {dimension_numbers = #tpu.dot_dimension_numbers<[1], [0], [0], [1], [0, 0, 1, 1], [], []>} : vector<16x64xf32>, vector<64x96xf32>, vector<16x96xf32> -> vector<16x96xf32>
    %24 = vector.broadcast %2 : vector<1x96xf32> to vector<16x96xf32>
    %25 = arith.addf %23, %24 : vector<16x96xf32>
    %26 = vector.extract_strided_slice %25 {offsets = [0, 0], sizes = [2, 96], strides = [1, 1]} : vector<16x96xf32> to vector<2x96xf32>
    %cst_21 = arith.constant dense<0.000000e+00> : vector<2x96xf32>
    %27 = tpu.matmul %15, %1, %cst_21 {dimension_numbers = #tpu.dot_dimension_numbers<[1], [0], [0], [1], [0, 0, 1, 1], [], []>} : vector<2x32xf32>, vector<32x96xf32>, vector<2x96xf32> -> vector<2x96xf32>
    %28 = vector.broadcast %3 : vector<1x96xf32> to vector<2x96xf32>
    %29 = arith.addf %27, %28 : vector<2x96xf32>
    %30 = vector.extract_strided_slice %26 {offsets = [0, 0], sizes = [2, 64], strides = [1, 1]} : vector<2x96xf32> to vector<2x64xf32>
    %31 = vector.extract_strided_slice %29 {offsets = [0, 0], sizes = [2, 64], strides = [1, 1]} : vector<2x96xf32> to vector<2x64xf32>
    %32 = arith.addf %30, %31 : vector<2x64xf32>
    %33 = arith.negf %32 : vector<2x64xf32>
    %34 = math.exp %33 : vector<2x64xf32>
    %cst_22 = arith.constant 1.000000e+00 : f32
    %35 = vector.broadcast %cst_22 : f32 to vector<2x64xf32>
    %36 = arith.addf %35, %34 : vector<2x64xf32>
    %37 = arith.divf %35, %36 : vector<2x64xf32>
    %38 = vector.extract_strided_slice %37 {offsets = [0, 0], sizes = [2, 32], strides = [1, 1]} : vector<2x64xf32> to vector<2x32xf32>
    %39 = vector.extract_strided_slice %37 {offsets = [0, 32], sizes = [2, 32], strides = [1, 1]} : vector<2x64xf32> to vector<2x32xf32>
    %40 = vector.extract_strided_slice %26 {offsets = [0, 64], sizes = [2, 32], strides = [1, 1]} : vector<2x96xf32> to vector<2x32xf32>
    %41 = vector.extract_strided_slice %29 {offsets = [0, 64], sizes = [2, 32], strides = [1, 1]} : vector<2x96xf32> to vector<2x32xf32>
    %42 = arith.mulf %38, %41 : vector<2x32xf32>
    %43 = arith.addf %40, %42 : vector<2x32xf32>
    %44 = math.tanh %43 : vector<2x32xf32>
    %cst_23 = arith.constant 1.000000e+00 : f32
    %45 = vector.broadcast %cst_23 : f32 to vector<2x32xf32>
    %46 = arith.subf %45, %39 : vector<2x32xf32>
    %47 = arith.mulf %46, %44 : vector<2x32xf32>
    %48 = arith.mulf %39, %15 : vector<2x32xf32>
    %49 = arith.addf %47, %48 : vector<2x32xf32>
    %50 = vector.extract_strided_slice %25 {offsets = [2, 0], sizes = [2, 96], strides = [1, 1]} : vector<16x96xf32> to vector<2x96xf32>
    %cst_24 = arith.constant dense<0.000000e+00> : vector<2x96xf32>
    %51 = tpu.matmul %49, %1, %cst_24 {dimension_numbers = #tpu.dot_dimension_numbers<[1], [0], [0], [1], [0, 0, 1, 1], [], []>} : vector<2x32xf32>, vector<32x96xf32>, vector<2x96xf32> -> vector<2x96xf32>
    %52 = vector.broadcast %3 : vector<1x96xf32> to vector<2x96xf32>
    %53 = arith.addf %51, %52 : vector<2x96xf32>
    %54 = vector.extract_strided_slice %50 {offsets = [0, 0], sizes = [2, 64], strides = [1, 1]} : vector<2x96xf32> to vector<2x64xf32>
    %55 = vector.extract_strided_slice %53 {offsets = [0, 0], sizes = [2, 64], strides = [1, 1]} : vector<2x96xf32> to vector<2x64xf32>
    %56 = arith.addf %54, %55 : vector<2x64xf32>
    %57 = arith.negf %56 : vector<2x64xf32>
    %58 = math.exp %57 : vector<2x64xf32>
    %cst_25 = arith.constant 1.000000e+00 : f32
    %59 = vector.broadcast %cst_25 : f32 to vector<2x64xf32>
    %60 = arith.addf %59, %58 : vector<2x64xf32>
    %61 = arith.divf %59, %60 : vector<2x64xf32>
    %62 = vector.extract_strided_slice %61 {offsets = [0, 0], sizes = [2, 32], strides = [1, 1]} : vector<2x64xf32> to vector<2x32xf32>
    %63 = vector.extract_strided_slice %61 {offsets = [0, 32], sizes = [2, 32], strides = [1, 1]} : vector<2x64xf32> to vector<2x32xf32>
    %64 = vector.extract_strided_slice %50 {offsets = [0, 64], sizes = [2, 32], strides = [1, 1]} : vector<2x96xf32> to vector<2x32xf32>
    %65 = vector.extract_strided_slice %53 {offsets = [0, 64], sizes = [2, 32], strides = [1, 1]} : vector<2x96xf32> to vector<2x32xf32>
    %66 = arith.mulf %62, %65 : vector<2x32xf32>
    %67 = arith.addf %64, %66 : vector<2x32xf32>
    %68 = math.tanh %67 : vector<2x32xf32>
    %cst_26 = arith.constant 1.000000e+00 : f32
    %69 = vector.broadcast %cst_26 : f32 to vector<2x32xf32>
    %70 = arith.subf %69, %63 : vector<2x32xf32>
    %71 = arith.mulf %70, %68 : vector<2x32xf32>
    %72 = arith.mulf %63, %49 : vector<2x32xf32>
    %73 = arith.addf %71, %72 : vector<2x32xf32>
    %74 = vector.extract_strided_slice %25 {offsets = [4, 0], sizes = [2, 96], strides = [1, 1]} : vector<16x96xf32> to vector<2x96xf32>
    %cst_27 = arith.constant dense<0.000000e+00> : vector<2x96xf32>
    %75 = tpu.matmul %73, %1, %cst_27 {dimension_numbers = #tpu.dot_dimension_numbers<[1], [0], [0], [1], [0, 0, 1, 1], [], []>} : vector<2x32xf32>, vector<32x96xf32>, vector<2x96xf32> -> vector<2x96xf32>
    %76 = vector.broadcast %3 : vector<1x96xf32> to vector<2x96xf32>
    %77 = arith.addf %75, %76 : vector<2x96xf32>
    %78 = vector.extract_strided_slice %74 {offsets = [0, 0], sizes = [2, 64], strides = [1, 1]} : vector<2x96xf32> to vector<2x64xf32>
    %79 = vector.extract_strided_slice %77 {offsets = [0, 0], sizes = [2, 64], strides = [1, 1]} : vector<2x96xf32> to vector<2x64xf32>
    %80 = arith.addf %78, %79 : vector<2x64xf32>
    %81 = arith.negf %80 : vector<2x64xf32>
    %82 = math.exp %81 : vector<2x64xf32>
    %cst_28 = arith.constant 1.000000e+00 : f32
    %83 = vector.broadcast %cst_28 : f32 to vector<2x64xf32>
    %84 = arith.addf %83, %82 : vector<2x64xf32>
    %85 = arith.divf %83, %84 : vector<2x64xf32>
    %86 = vector.extract_strided_slice %85 {offsets = [0, 0], sizes = [2, 32], strides = [1, 1]} : vector<2x64xf32> to vector<2x32xf32>
    %87 = vector.extract_strided_slice %85 {offsets = [0, 32], sizes = [2, 32], strides = [1, 1]} : vector<2x64xf32> to vector<2x32xf32>
    %88 = vector.extract_strided_slice %74 {offsets = [0, 64], sizes = [2, 32], strides = [1, 1]} : vector<2x96xf32> to vector<2x32xf32>
    %89 = vector.extract_strided_slice %77 {offsets = [0, 64], sizes = [2, 32], strides = [1, 1]} : vector<2x96xf32> to vector<2x32xf32>
    %90 = arith.mulf %86, %89 : vector<2x32xf32>
    %91 = arith.addf %88, %90 : vector<2x32xf32>
    %92 = math.tanh %91 : vector<2x32xf32>
    %cst_29 = arith.constant 1.000000e+00 : f32
    %93 = vector.broadcast %cst_29 : f32 to vector<2x32xf32>
    %94 = arith.subf %93, %87 : vector<2x32xf32>
    %95 = arith.mulf %94, %92 : vector<2x32xf32>
    %96 = arith.mulf %87, %73 : vector<2x32xf32>
    %97 = arith.addf %95, %96 : vector<2x32xf32>
    %98 = vector.extract_strided_slice %25 {offsets = [6, 0], sizes = [2, 96], strides = [1, 1]} : vector<16x96xf32> to vector<2x96xf32>
    %cst_30 = arith.constant dense<0.000000e+00> : vector<2x96xf32>
    %99 = tpu.matmul %97, %1, %cst_30 {dimension_numbers = #tpu.dot_dimension_numbers<[1], [0], [0], [1], [0, 0, 1, 1], [], []>} : vector<2x32xf32>, vector<32x96xf32>, vector<2x96xf32> -> vector<2x96xf32>
    %100 = vector.broadcast %3 : vector<1x96xf32> to vector<2x96xf32>
    %101 = arith.addf %99, %100 : vector<2x96xf32>
    %102 = vector.extract_strided_slice %98 {offsets = [0, 0], sizes = [2, 64], strides = [1, 1]} : vector<2x96xf32> to vector<2x64xf32>
    %103 = vector.extract_strided_slice %101 {offsets = [0, 0], sizes = [2, 64], strides = [1, 1]} : vector<2x96xf32> to vector<2x64xf32>
    %104 = arith.addf %102, %103 : vector<2x64xf32>
    %105 = arith.negf %104 : vector<2x64xf32>
    %106 = math.exp %105 : vector<2x64xf32>
    %cst_31 = arith.constant 1.000000e+00 : f32
    %107 = vector.broadcast %cst_31 : f32 to vector<2x64xf32>
    %108 = arith.addf %107, %106 : vector<2x64xf32>
    %109 = arith.divf %107, %108 : vector<2x64xf32>
    %110 = vector.extract_strided_slice %109 {offsets = [0, 0], sizes = [2, 32], strides = [1, 1]} : vector<2x64xf32> to vector<2x32xf32>
    %111 = vector.extract_strided_slice %109 {offsets = [0, 32], sizes = [2, 32], strides = [1, 1]} : vector<2x64xf32> to vector<2x32xf32>
    %112 = vector.extract_strided_slice %98 {offsets = [0, 64], sizes = [2, 32], strides = [1, 1]} : vector<2x96xf32> to vector<2x32xf32>
    %113 = vector.extract_strided_slice %101 {offsets = [0, 64], sizes = [2, 32], strides = [1, 1]} : vector<2x96xf32> to vector<2x32xf32>
    %114 = arith.mulf %110, %113 : vector<2x32xf32>
    %115 = arith.addf %112, %114 : vector<2x32xf32>
    %116 = math.tanh %115 : vector<2x32xf32>
    %cst_32 = arith.constant 1.000000e+00 : f32
    %117 = vector.broadcast %cst_32 : f32 to vector<2x32xf32>
    %118 = arith.subf %117, %111 : vector<2x32xf32>
    %119 = arith.mulf %118, %116 : vector<2x32xf32>
    %120 = arith.mulf %111, %97 : vector<2x32xf32>
    %121 = arith.addf %119, %120 : vector<2x32xf32>
    %122 = vector.extract_strided_slice %25 {offsets = [8, 0], sizes = [2, 96], strides = [1, 1]} : vector<16x96xf32> to vector<2x96xf32>
    %cst_33 = arith.constant dense<0.000000e+00> : vector<2x96xf32>
    %123 = tpu.matmul %121, %1, %cst_33 {dimension_numbers = #tpu.dot_dimension_numbers<[1], [0], [0], [1], [0, 0, 1, 1], [], []>} : vector<2x32xf32>, vector<32x96xf32>, vector<2x96xf32> -> vector<2x96xf32>
    %124 = vector.broadcast %3 : vector<1x96xf32> to vector<2x96xf32>
    %125 = arith.addf %123, %124 : vector<2x96xf32>
    %126 = vector.extract_strided_slice %122 {offsets = [0, 0], sizes = [2, 64], strides = [1, 1]} : vector<2x96xf32> to vector<2x64xf32>
    %127 = vector.extract_strided_slice %125 {offsets = [0, 0], sizes = [2, 64], strides = [1, 1]} : vector<2x96xf32> to vector<2x64xf32>
    %128 = arith.addf %126, %127 : vector<2x64xf32>
    %129 = arith.negf %128 : vector<2x64xf32>
    %130 = math.exp %129 : vector<2x64xf32>
    %cst_34 = arith.constant 1.000000e+00 : f32
    %131 = vector.broadcast %cst_34 : f32 to vector<2x64xf32>
    %132 = arith.addf %131, %130 : vector<2x64xf32>
    %133 = arith.divf %131, %132 : vector<2x64xf32>
    %134 = vector.extract_strided_slice %133 {offsets = [0, 0], sizes = [2, 32], strides = [1, 1]} : vector<2x64xf32> to vector<2x32xf32>
    %135 = vector.extract_strided_slice %133 {offsets = [0, 32], sizes = [2, 32], strides = [1, 1]} : vector<2x64xf32> to vector<2x32xf32>
    %136 = vector.extract_strided_slice %122 {offsets = [0, 64], sizes = [2, 32], strides = [1, 1]} : vector<2x96xf32> to vector<2x32xf32>
    %137 = vector.extract_strided_slice %125 {offsets = [0, 64], sizes = [2, 32], strides = [1, 1]} : vector<2x96xf32> to vector<2x32xf32>
    %138 = arith.mulf %134, %137 : vector<2x32xf32>
    %139 = arith.addf %136, %138 : vector<2x32xf32>
    %140 = math.tanh %139 : vector<2x32xf32>
    %cst_35 = arith.constant 1.000000e+00 : f32
    %141 = vector.broadcast %cst_35 : f32 to vector<2x32xf32>
    %142 = arith.subf %141, %135 : vector<2x32xf32>
    %143 = arith.mulf %142, %140 : vector<2x32xf32>
    %144 = arith.mulf %135, %121 : vector<2x32xf32>
    %145 = arith.addf %143, %144 : vector<2x32xf32>
    %146 = vector.extract_strided_slice %25 {offsets = [10, 0], sizes = [2, 96], strides = [1, 1]} : vector<16x96xf32> to vector<2x96xf32>
    %cst_36 = arith.constant dense<0.000000e+00> : vector<2x96xf32>
    %147 = tpu.matmul %145, %1, %cst_36 {dimension_numbers = #tpu.dot_dimension_numbers<[1], [0], [0], [1], [0, 0, 1, 1], [], []>} : vector<2x32xf32>, vector<32x96xf32>, vector<2x96xf32> -> vector<2x96xf32>
    %148 = vector.broadcast %3 : vector<1x96xf32> to vector<2x96xf32>
    %149 = arith.addf %147, %148 : vector<2x96xf32>
    %150 = vector.extract_strided_slice %146 {offsets = [0, 0], sizes = [2, 64], strides = [1, 1]} : vector<2x96xf32> to vector<2x64xf32>
    %151 = vector.extract_strided_slice %149 {offsets = [0, 0], sizes = [2, 64], strides = [1, 1]} : vector<2x96xf32> to vector<2x64xf32>
    %152 = arith.addf %150, %151 : vector<2x64xf32>
    %153 = arith.negf %152 : vector<2x64xf32>
    %154 = math.exp %153 : vector<2x64xf32>
    %cst_37 = arith.constant 1.000000e+00 : f32
    %155 = vector.broadcast %cst_37 : f32 to vector<2x64xf32>
    %156 = arith.addf %155, %154 : vector<2x64xf32>
    %157 = arith.divf %155, %156 : vector<2x64xf32>
    %158 = vector.extract_strided_slice %157 {offsets = [0, 0], sizes = [2, 32], strides = [1, 1]} : vector<2x64xf32> to vector<2x32xf32>
    %159 = vector.extract_strided_slice %157 {offsets = [0, 32], sizes = [2, 32], strides = [1, 1]} : vector<2x64xf32> to vector<2x32xf32>
    %160 = vector.extract_strided_slice %146 {offsets = [0, 64], sizes = [2, 32], strides = [1, 1]} : vector<2x96xf32> to vector<2x32xf32>
    %161 = vector.extract_strided_slice %149 {offsets = [0, 64], sizes = [2, 32], strides = [1, 1]} : vector<2x96xf32> to vector<2x32xf32>
    %162 = arith.mulf %158, %161 : vector<2x32xf32>
    %163 = arith.addf %160, %162 : vector<2x32xf32>
    %164 = math.tanh %163 : vector<2x32xf32>
    %cst_38 = arith.constant 1.000000e+00 : f32
    %165 = vector.broadcast %cst_38 : f32 to vector<2x32xf32>
    %166 = arith.subf %165, %159 : vector<2x32xf32>
    %167 = arith.mulf %166, %164 : vector<2x32xf32>
    %168 = arith.mulf %159, %145 : vector<2x32xf32>
    %169 = arith.addf %167, %168 : vector<2x32xf32>
    %170 = vector.extract_strided_slice %25 {offsets = [12, 0], sizes = [2, 96], strides = [1, 1]} : vector<16x96xf32> to vector<2x96xf32>
    %cst_39 = arith.constant dense<0.000000e+00> : vector<2x96xf32>
    %171 = tpu.matmul %169, %1, %cst_39 {dimension_numbers = #tpu.dot_dimension_numbers<[1], [0], [0], [1], [0, 0, 1, 1], [], []>} : vector<2x32xf32>, vector<32x96xf32>, vector<2x96xf32> -> vector<2x96xf32>
    %172 = vector.broadcast %3 : vector<1x96xf32> to vector<2x96xf32>
    %173 = arith.addf %171, %172 : vector<2x96xf32>
    %174 = vector.extract_strided_slice %170 {offsets = [0, 0], sizes = [2, 64], strides = [1, 1]} : vector<2x96xf32> to vector<2x64xf32>
    %175 = vector.extract_strided_slice %173 {offsets = [0, 0], sizes = [2, 64], strides = [1, 1]} : vector<2x96xf32> to vector<2x64xf32>
    %176 = arith.addf %174, %175 : vector<2x64xf32>
    %177 = arith.negf %176 : vector<2x64xf32>
    %178 = math.exp %177 : vector<2x64xf32>
    %cst_40 = arith.constant 1.000000e+00 : f32
    %179 = vector.broadcast %cst_40 : f32 to vector<2x64xf32>
    %180 = arith.addf %179, %178 : vector<2x64xf32>
    %181 = arith.divf %179, %180 : vector<2x64xf32>
    %182 = vector.extract_strided_slice %181 {offsets = [0, 0], sizes = [2, 32], strides = [1, 1]} : vector<2x64xf32> to vector<2x32xf32>
    %183 = vector.extract_strided_slice %181 {offsets = [0, 32], sizes = [2, 32], strides = [1, 1]} : vector<2x64xf32> to vector<2x32xf32>
    %184 = vector.extract_strided_slice %170 {offsets = [0, 64], sizes = [2, 32], strides = [1, 1]} : vector<2x96xf32> to vector<2x32xf32>
    %185 = vector.extract_strided_slice %173 {offsets = [0, 64], sizes = [2, 32], strides = [1, 1]} : vector<2x96xf32> to vector<2x32xf32>
    %186 = arith.mulf %182, %185 : vector<2x32xf32>
    %187 = arith.addf %184, %186 : vector<2x32xf32>
    %188 = math.tanh %187 : vector<2x32xf32>
    %cst_41 = arith.constant 1.000000e+00 : f32
    %189 = vector.broadcast %cst_41 : f32 to vector<2x32xf32>
    %190 = arith.subf %189, %183 : vector<2x32xf32>
    %191 = arith.mulf %190, %188 : vector<2x32xf32>
    %192 = arith.mulf %183, %169 : vector<2x32xf32>
    %193 = arith.addf %191, %192 : vector<2x32xf32>
    %194 = vector.extract_strided_slice %25 {offsets = [14, 0], sizes = [2, 96], strides = [1, 1]} : vector<16x96xf32> to vector<2x96xf32>
    %cst_42 = arith.constant dense<0.000000e+00> : vector<2x96xf32>
    %195 = tpu.matmul %193, %1, %cst_42 {dimension_numbers = #tpu.dot_dimension_numbers<[1], [0], [0], [1], [0, 0, 1, 1], [], []>} : vector<2x32xf32>, vector<32x96xf32>, vector<2x96xf32> -> vector<2x96xf32>
    %196 = vector.broadcast %3 : vector<1x96xf32> to vector<2x96xf32>
    %197 = arith.addf %195, %196 : vector<2x96xf32>
    %198 = vector.extract_strided_slice %194 {offsets = [0, 0], sizes = [2, 64], strides = [1, 1]} : vector<2x96xf32> to vector<2x64xf32>
    %199 = vector.extract_strided_slice %197 {offsets = [0, 0], sizes = [2, 64], strides = [1, 1]} : vector<2x96xf32> to vector<2x64xf32>
    %200 = arith.addf %198, %199 : vector<2x64xf32>
    %201 = arith.negf %200 : vector<2x64xf32>
    %202 = math.exp %201 : vector<2x64xf32>
    %cst_43 = arith.constant 1.000000e+00 : f32
    %203 = vector.broadcast %cst_43 : f32 to vector<2x64xf32>
    %204 = arith.addf %203, %202 : vector<2x64xf32>
    %205 = arith.divf %203, %204 : vector<2x64xf32>
    %206 = vector.extract_strided_slice %205 {offsets = [0, 0], sizes = [2, 32], strides = [1, 1]} : vector<2x64xf32> to vector<2x32xf32>
    %207 = vector.extract_strided_slice %205 {offsets = [0, 32], sizes = [2, 32], strides = [1, 1]} : vector<2x64xf32> to vector<2x32xf32>
    %208 = vector.extract_strided_slice %194 {offsets = [0, 64], sizes = [2, 32], strides = [1, 1]} : vector<2x96xf32> to vector<2x32xf32>
    %209 = vector.extract_strided_slice %197 {offsets = [0, 64], sizes = [2, 32], strides = [1, 1]} : vector<2x96xf32> to vector<2x32xf32>
    %210 = arith.mulf %206, %209 : vector<2x32xf32>
    %211 = arith.addf %208, %210 : vector<2x32xf32>
    %212 = math.tanh %211 : vector<2x32xf32>
    %cst_44 = arith.constant 1.000000e+00 : f32
    %213 = vector.broadcast %cst_44 : f32 to vector<2x32xf32>
    %214 = arith.subf %213, %207 : vector<2x32xf32>
    %215 = arith.mulf %214, %212 : vector<2x32xf32>
    %216 = arith.mulf %207, %193 : vector<2x32xf32>
    %217 = arith.addf %215, %216 : vector<2x32xf32>
    %c0_45 = arith.constant 0 : index
    %c0_46 = arith.constant 0 : index
    %218 = vector.load %arg11[%c0_45, %c0_46] : memref<2x32xf32, #tpu.memory_space<vmem>>, vector<2x32xf32>
    tpu.vector_store %arg11[%c0_45, %c0_46], %217 {strides = array<i32>} : memref<2x32xf32, #tpu.memory_space<vmem>>, vector<2x32xf32>,
    %219 = vector.shape_cast %49 : vector<2x32xf32> to vector<2x1x32xf32>
    %220 = vector.shape_cast %73 : vector<2x32xf32> to vector<2x1x32xf32>
    %221 = vector.shape_cast %97 : vector<2x32xf32> to vector<2x1x32xf32>
    %222 = vector.shape_cast %121 : vector<2x32xf32> to vector<2x1x32xf32>
    %223 = vector.shape_cast %145 : vector<2x32xf32> to vector<2x1x32xf32>
    %224 = vector.shape_cast %169 : vector<2x32xf32> to vector<2x1x32xf32>
    %225 = vector.shape_cast %193 : vector<2x32xf32> to vector<2x1x32xf32>
    %226 = vector.shape_cast %217 : vector<2x32xf32> to vector<2x1x32xf32>
    %227 = tpu.concatenate %219, %220, %221, %222, %223, %224, %225, %226 in 1 : vector<2x1x32xf32>, vector<2x1x32xf32>, vector<2x1x32xf32>, vector<2x1x32xf32>, vector<2x1x32xf32>, vector<2x1x32xf32>, vector<2x1x32xf32>, vector<2x1x32xf32> -> vector<2x8x32xf32>
    %c0_47 = arith.constant 0 : index
    %c0_48 = arith.constant 0 : index
    %c0_49 = arith.constant 0 : index
    %228 = vector.load %arg3[%c0_47, %c0_48, %c0_49] : memref<2x8x32xf32, #tpu.memory_space<vmem>>, vector<2x8x32xf32>
    "tpu.trace_start"() <{level = 10 : i32, message = "bth,bsh->bts"}> : () -> ()
    %cst_50 = arith.constant dense<0.000000e+00> : vector<2x8x8xf32>
    %229 = tpu.matmul %227, %228, %cst_50 {dimension_numbers = #tpu.dot_dimension_numbers<[2], [2], [1], [1], [0, 0, 0, 1, 1, 1], [0], [0]>} : vector<2x8x32xf32>, vector<2x8x32xf32>, vector<2x8x8xf32> -> vector<2x8x8xf32>
    "tpu.trace_stop"() : () -> ()
    %cst_51 = arith.constant dense<0xFF800000> : vector<2x8xf32>
    %230 = vector.multi_reduction <maximumf>, %229, %cst_51 [2] : vector<2x8x8xf32> to vector<2x8xf32>
    %cst_52 = arith.constant 0xFF800000 : f32
    %231 = vector.broadcast %cst_52 : f32 to vector<2x8xf32>
    %232 = arith.maximumf %231, %230 : vector<2x8xf32>
    %233 = vector.shape_cast %232 : vector<2x8xf32> to vector<2x8x1xf32>
    %234 = vector.broadcast %233 : vector<2x8x1xf32> to vector<2x8x8xf32>
    %235 = arith.subf %229, %234 : vector<2x8x8xf32>
    %236 = math.exp %235 : vector<2x8x8xf32>
    %cst_53 = arith.constant dense<0.000000e+00> : vector<2x8xf32>
    %237 = vector.multi_reduction <add>, %236, %cst_53 [2] : vector<2x8x8xf32> to vector<2x8xf32>
    %238 = vector.shape_cast %237 : vector<2x8xf32> to vector<2x8x1xf32>
    %239 = vector.broadcast %238 : vector<2x8x1xf32> to vector<2x8x8xf32>
    %240 = arith.divf %236, %239 : vector<2x8x8xf32>
    "tpu.trace_start"() <{level = 10 : i32, message = "bts,bsh->bth"}> : () -> ()
    %cst_54 = arith.constant dense<0.000000e+00> : vector<2x8x32xf32>
    %241 = tpu.matmul %240, %228, %cst_54 {dimension_numbers = #tpu.dot_dimension_numbers<[2], [1], [1], [2], [0, 0, 0, 1, 1, 2], [0], [0]>} : vector<2x8x8xf32>, vector<2x8x32xf32>, vector<2x8x32xf32> -> vector<2x8x32xf32>
    "tpu.trace_stop"() : () -> ()
    %242 = vector.shape_cast %227 : vector<2x8x32xf32> to vector<16x32xf32>
    %243 = vector.shape_cast %241 : vector<2x8x32xf32> to vector<16x32xf32>
    %244 = tpu.concatenate %243, %242 in 1 : vector<16x32xf32>, vector<16x32xf32> -> vector<16x64xf32>
    %cst_55 = arith.constant dense<0.000000e+00> : vector<16x32xf32>
    %245 = tpu.matmul %244, %4, %cst_55 {dimension_numbers = #tpu.dot_dimension_numbers<[1], [0], [0], [1], [0, 0, 1, 1], [], []>} : vector<16x64xf32>, vector<64x32xf32>, vector<16x32xf32> -> vector<16x32xf32>
    %246 = vector.broadcast %7 : vector<1x32xf32> to vector<16x32xf32>
    %247 = arith.addf %245, %246 : vector<16x32xf32>
    %248 = math.tanh %247 : vector<16x32xf32>
    %cst_56 = arith.constant dense<0.000000e+00> : vector<16x65xf32>
    %249 = tpu.matmul %248, %8, %cst_56 {dimension_numbers = #tpu.dot_dimension_numbers<[1], [0], [0], [1], [0, 0, 1, 1], [], []>} : vector<16x32xf32>, vector<32x65xf32>, vector<16x65xf32> -> vector<16x65xf32>
    %250 = vector.broadcast %9 : vector<1x65xf32> to vector<16x65xf32>
    %251 = arith.addf %249, %250 : vector<16x65xf32>
    %252 = vector.extract_strided_slice %251 {offsets = [0, 0], sizes = [16, 64], strides = [1, 1]} : vector<16x65xf32> to vector<16x64xf32>
    %cst_57 = arith.constant dense<0xFF800000> : vector<16xf32>
    %253 = vector.multi_reduction <maximumf>, %252, %cst_57 [1] : vector<16x64xf32> to vector<16xf32>
    %cst_58 = arith.constant 0xFF800000 : f32
    %254 = vector.broadcast %cst_58 : f32 to vector<16xf32>
    %255 = arith.maximumf %254, %253 : vector<16xf32>
    %256 = vector.shape_cast %255 : vector<16xf32> to vector<16x1xf32>
    %257 = vector.broadcast %256 : vector<16x1xf32> to vector<16x64xf32>
    %258 = arith.subf %252, %257 : vector<16x64xf32>
    %259 = math.exp %258 : vector<16x64xf32>
    %cst_59 = arith.constant dense<0.000000e+00> : vector<16xf32>
    %260 = vector.multi_reduction <add>, %259, %cst_59 [1] : vector<16x64xf32> to vector<16xf32>
    %261 = vector.shape_cast %260 : vector<16xf32> to vector<16x1xf32>
    %262 = vector.broadcast %261 : vector<16x1xf32> to vector<16x64xf32>
    %263 = arith.divf %259, %262 : vector<16x64xf32>
    %264 = vector.extract_strided_slice %251 {offsets = [0, 64], sizes = [16, 1], strides = [1, 1]} : vector<16x65xf32> to vector<16x1xf32>
    %265 = arith.negf %264 : vector<16x1xf32>
    %266 = math.exp %265 : vector<16x1xf32>
    %cst_60 = arith.constant 1.000000e+00 : f32
    %267 = vector.broadcast %cst_60 : f32 to vector<16x1xf32>
    %268 = arith.addf %267, %266 : vector<16x1xf32>
    %269 = arith.divf %267, %268 : vector<16x1xf32>
    %270 = vector.broadcast %269 : vector<16x1xf32> to vector<16x64xf32>
    %271 = arith.mulf %270, %263 : vector<16x64xf32>
    %cst_61 = arith.constant 1.000000e+00 : f32
    %272 = vector.broadcast %cst_61 : f32 to vector<16x1xf32>
    %273 = arith.subf %272, %269 : vector<16x1xf32>
    %274 = vector.shape_cast %273 : vector<16x1xf32> to vector<2x8x1xf32>
    %275 = vector.broadcast %274 : vector<2x8x1xf32> to vector<2x8x8xf32>
    %276 = arith.mulf %275, %240 : vector<2x8x8xf32>
    %c0_62 = arith.constant 0 : index
    %c0_63 = arith.constant 0 : index
    %277 = vector.load %arg2[%c0_62, %c0_63] : memref<2x8xi32, #tpu.memory_space<vmem>>, vector<2x8xi32>
    %278 = vector.shape_cast %277 : vector<2x8xi32> to vector<2x8x1xi32>
    %279 = tpu.iota {dimensions = array<i32: 2>} : vector<2x8x64xi32>
    %280 = vector.broadcast %278 : vector<2x8x1xi32> to vector<2x8x64xi32>
    %281 = arith.cmpi eq, %280, %279 : vector<2x8x64xi32>
    %282 = arith.extui %281 : vector<2x8x64xi1> to vector<2x8x64xi32>
    %283 = arith.sitofp %282 : vector<2x8x64xi32> to vector<2x8x64xf32>
    "tpu.trace_start"() <{level = 10 : i32, message = "bts,bsv->btv"}> : () -> ()
    %cst_64 = arith.constant dense<0.000000e+00> : vector<2x8x64xf32>
    %284 = tpu.matmul %276, %283, %cst_64 {dimension_numbers = #tpu.dot_dimension_numbers<[2], [1], [1], [2], [0, 0, 0, 1, 1, 2], [0], [0]>} : vector<2x8x8xf32>, vector<2x8x64xf32>, vector<2x8x64xf32> -> vector<2x8x64xf32>
    "tpu.trace_stop"() : () -> ()
    %285 = vector.shape_cast %284 : vector<2x8x64xf32> to vector<16x64xf32>
    %286 = arith.addf %271, %285 : vector<16x64xf32>
    %287 = math.log %286 : vector<16x64xf32>
    %c0_65 = arith.constant 0 : index
    %c0_66 = arith.constant 0 : index
    %288 = vector.load %arg8[%c0_65, %c0_66] : memref<16x64xf32, #tpu.memory_space<vmem>>, vector<16x64xf32>
    tpu.vector_store %arg8[%c0_65, %c0_66], %287 {strides = array<i32>} : memref<16x64xf32, #tpu.memory_space<vmem>>, vector<16x64xf32>,
    %289 = vector.shape_cast %240 : vector<2x8x8xf32> to vector<16x8xf32>
    %c0_67 = arith.constant 0 : index
    %c0_68 = arith.constant 0 : index
    %290 = vector.load %arg9[%c0_67, %c0_68] : memref<16x8xf32, #tpu.memory_space<vmem>>, vector<16x8xf32>
    tpu.vector_store %arg9[%c0_67, %c0_68], %289 {strides = array<i32>} : memref<16x8xf32, #tpu.memory_space<vmem>>, vector<16x8xf32>,
    %c0_69 = arith.constant 0 : index
    %c0_70 = arith.constant 0 : index
    %291 = vector.load %arg10[%c0_69, %c0_70] : memref<16x32xf32, #tpu.memory_space<vmem>>, vector<16x32xf32>
    tpu.vector_store %arg10[%c0_69, %c0_70], %248 {strides = array<i32>} : memref<16x32xf32, #tpu.memory_space<vmem>>, vector<16x32xf32>,
    return
  }
  func.func @transform_0(%arg0: i32) -> (i32, i32) {
    %c0_i32 = arith.constant 0 : i32
    %c0_i32_0 = arith.constant 0 : i32
    %c0_i32_1 = arith.constant 0 : i32
    return %c0_i32, %c0_i32_0 : i32, i32
  }
  func.func @transform_1(%arg0: i32) -> (i32, i32) {
    %c0_i32 = arith.constant 0 : i32
    %c0_i32_0 = arith.constant 0 : i32
    %c0_i32_1 = arith.constant 0 : i32
    return %c0_i32, %c0_i32_0 : i32, i32
  }
  func.func @transform_2(%arg0: i32) -> (i32, i32, i32) {
    %c0_i32 = arith.constant 0 : i32
    %c0_i32_0 = arith.constant 0 : i32
    %c0_i32_1 = arith.constant 0 : i32
    %c0_i32_2 = arith.constant 0 : i32
    return %c0_i32, %c0_i32_0, %c0_i32_1 : i32, i32, i32
  }
  func.func @transform_3(%arg0: i32) -> (i32, i32) {
    %c0_i32 = arith.constant 0 : i32
    %c0_i32_0 = arith.constant 0 : i32
    %c0_i32_1 = arith.constant 0 : i32
    return %c0_i32, %c0_i32_0 : i32, i32
  }
  func.func @transform_4(%arg0: i32) -> (i32, i32) {
    %c0_i32 = arith.constant 0 : i32
    %c0_i32_0 = arith.constant 0 : i32
    %c0_i32_1 = arith.constant 0 : i32
    return %c0_i32, %c0_i32_0 : i32, i32
  }
  func.func @transform_5(%arg0: i32) -> (i32, i32) {
    %c0_i32 = arith.constant 0 : i32
    %c0_i32_0 = arith.constant 0 : i32
    %c0_i32_1 = arith.constant 0 : i32
    return %c0_i32, %c0_i32_0 : i32, i32
  }
  func.func @transform_6(%arg0: i32) -> (i32, i32) {
    %c0_i32 = arith.constant 0 : i32
    %c0_i32_0 = arith.constant 0 : i32
    %c0_i32_1 = arith.constant 0 : i32
    return %c0_i32, %c0_i32_0 : i32, i32
  }
  func.func @transform_7(%arg0: i32) -> (i32, i32) {
    %c0_i32 = arith.constant 0 : i32
    %c0_i32_0 = arith.constant 0 : i32
    %c0_i32_1 = arith.constant 0 : i32
    return %c0_i32, %c0_i32_0 : i32, i32
  }
  func.func @transform_8(%arg0: i32) -> (i32, i32) {
    %c0_i32 = arith.constant 0 : i32
    %c0_i32_0 = arith.constant 0 : i32
    %c0_i32_1 = arith.constant 0 : i32
    return %c0_i32, %c0_i32_0 : i32, i32
  }
  func.func @transform_9(%arg0: i32) -> (i32, i32) {
    %c0_i32 = arith.constant 0 : i32
    %c0_i32_0 = arith.constant 0 : i32
    %c0_i32_1 = arith.constant 0 : i32
    return %c0_i32, %c0_i32_0 : i32, i32
  }
  func.func @transform_10(%arg0: i32) -> (i32, i32) {
    %c0_i32 = arith.constant 0 : i32
    %c0_i32_0 = arith.constant 0 : i32
    %c0_i32_1 = arith.constant 0 : i32
    return %c0_i32, %c0_i32_0 : i32, i32
  }
  func.func @transform_11(%arg0: i32) -> (i32, i32) {
    %c0_i32 = arith.constant 0 : i32
    %c0_i32_0 = arith.constant 0 : i32
    %c0_i32_1 = arith.constant 0 : i32
    return %c0_i32, %c0_i32_0 : i32, i32
  }
}

</mosaic_0001>

<llo_original>
// kernel: _device_forward.1
$region0: #{_device_forward.1}
  #allocation0 [shape = 'u32[]', space=smem, size = 0x4, offset = 0x4, fixed_abs, tag = 'smem constant byte address 0x4 - core index']
  #allocation1 [shape = 'u32[144,128]{1,0:T(1,128)}', space=vmem, size = 0x12000, scoped, tag = 'internal scratch']
  %s0 = inlined_call_operand.vmem [shape: s32[16,1], index: 0, kind: input, shape index: {}]
  %s1 = inlined_call_operand.vmem [shape: s32[2,8], index: 1, kind: input, shape index: {}]
  %s2 = inlined_call_operand.vmem [shape: f32[2,8,32], index: 2, kind: input, shape index: {}]
  %s3 = inlined_call_operand.vmem [shape: f32[2,24], index: 3, kind: input, shape index: {}]
  %s4 = inlined_call_operand.vmem [shape: f32[98,96], index: 4, kind: input, shape index: {}]
  %s5 = inlined_call_operand.vmem [shape: f32[90,32], index: 5, kind: input, shape index: {}]
  %s6 = inlined_call_operand.vmem [shape: f32[33,65], index: 6, kind: input, shape index: {}]
  %s7 = inlined_call_operand.vmem [shape: f32[16,64], index: 7, kind: output, shape index: {0}]
  %s8 = inlined_call_operand.hbm [shape: f32[16,8], index: 8, kind: output, shape index: {1}]
  %s9 = inlined_call_operand.hbm [shape: f32[16,32], index: 9, kind: output, shape index: {2}]
  %s10 = inlined_call_operand.hbm [shape: f32[2,32], index: 10, kind: output, shape index: {3}]
  %s11 = inlined_call_operand.hbm [shape: f32[2,32], index: 11, kind: output, shape index: {4}]
  %12 = xla_tuple %s7, %s8, %s9, %s10, %s11
  %s13 = sld [smem:[#allocation0]]
  $region70: #{_device_forward.1} parent=0
    _
  %s15 = ssub.s32 1, %s13
  %s16 = scalar_select 0, %s15, %s13
  $region1: #{_device_forward.1} parent=0
    #allocation2 [shape = 'u8[8192]{0}', space=vmem, size = 0x2000, scoped, tag = 'output window, operand 1, single buffered']
    #allocation3 [shape = 's32[1]{0}', space=sflag, size = 0x4, scoped, tag = 'scoped memory for _device_forward.1']
    #allocation4 [shape = 'u8[8192]{0}', space=vmem, size = 0x2000, scoped, tag = 'output window, operand 2, single buffered']
    #allocation5 [shape = 's32[1]{0}', space=sflag, size = 0x4, scoped, tag = 'scoped memory for _device_forward.1']
    #allocation6 [shape = 'u8[1024]{0}', space=vmem, size = 0x400, scoped, tag = 'output window, operand 3, single buffered']
    #allocation7 [shape = 'u8[1024]{0}', space=vmem, size = 0x400, scoped, tag = 'output window, operand 4, single buffered']
    #allocation8 [shape = 's32[1]{0}', space=sflag, size = 0x4, scoped, tag = 'scoped memory for _device_forward.1']
    %17 = vsyncpa [#allocation3], 0
    %18 = vsyncpa [#allocation5], 0
    %19 = vsyncpa [#allocation8], 0
    // Predicated region
    $region2: #{_device_forward.1} parent=1 // pred_check
      _
    $region3: #{_device_forward.1} parent=1 // pred_check_branch
      %21 = sbr.rel (0) target = $region5
    $region4: #{_device_forward.1} parent=1 // pred_region
      _
    $region5: #{_device_forward.1} parent=1 // pred_fallthru
      _
    // Predicated region
    $region6: #{_device_forward.1} parent=1 // pred_check
      _
    $region7: #{_device_forward.1} parent=1 // pred_check_branch
      %23 = sbr.rel (0) target = $region9
    $region8: #{_device_forward.1} parent=1 // pred_region
      _
    $region9: #{_device_forward.1} parent=1 // pred_fallthru
      _
    // Predicated region
    $region10: #{_device_forward.1} parent=1 // pred_check
      _
    $region11: #{_device_forward.1} parent=1 // pred_check_branch
      %25 = sbr.rel (0) target = $region13
    $region12: #{_device_forward.1} parent=1 // pred_region
      _
    $region13: #{_device_forward.1} parent=1 // pred_fallthru
      _
    // Predicated region
    $region14: #{_device_forward.1} parent=1 // pred_check
      _
    $region15: #{_device_forward.1} parent=1 // pred_check_branch
      %27 = sbr.rel (0) target = $region17
    $region16: #{_device_forward.1} parent=1 // pred_region
      _
    $region17: #{_device_forward.1} parent=1 // pred_fallthru
      _
    // Predicated region
    $region18: #{_device_forward.1} parent=1 // pred_check
      _
    $region19: #{_device_forward.1} parent=1 // pred_check_branch
      %29 = sbr.rel (0) target = $region21
    $region20: #{_device_forward.1} parent=1 // pred_region
      _
    $region21: #{_device_forward.1} parent=1 // pred_fallthru
      _
    // Predicated region
    $region22: #{_device_forward.1} parent=1 // pred_check
      _
    $region23: #{_device_forward.1} parent=1 // pred_check_branch
      %31 = sbr.rel (0) target = $region25
    $region24: #{_device_forward.1} parent=1 // pred_region
      _
    $region25: #{_device_forward.1} parent=1 // pred_fallthru
      _
    // Predicated region
    $region26: #{_device_forward.1} parent=1 // pred_check
      _
    $region27: #{_device_forward.1} parent=1 // pred_check_branch
      %33 = sbr.rel (0) target = $region29
    $region28: #{_device_forward.1} parent=1 // pred_region
      _
    $region29: #{_device_forward.1} parent=1 // pred_fallthru
      _
    %v34 = vld [vmem:[%s4] sm:$0xff]
    %v35 = vld [vmem:[%s4 + $0x8] sm:$0xff]
    %v36 = vld [vmem:[%s4 + $0x10] sm:$0xff]
    %v37 = vld [vmem:[%s4 + $0x18] sm:$0xff]
    %v38 = vld [vmem:[%s4 + $0x20] sm:$0xff]
    %v39 = vld [vmem:[%s4 + $0x28] sm:$0xff]
    %v40 = vld [vmem:[%s4 + $0x30] sm:$0xff]
    %v41 = vld [vmem:[%s4 + $0x38] sm:$0xff]
    %v42 = vld [vmem:[%s4 + $0x40] sm:$0xff]
    %v43 = vld [vmem:[%s4 + $0x48] sm:$0xff]
    %v44 = vld [vmem:[%s4 + $0x50] sm:$0xff]
    %v45 = vld [vmem:[%s4 + $0x58] sm:$0xff]
    %v46 = vld [vmem:[%s4 + $0x60] sm:$0x1]
    %v47 = vld [vmem:[%s4 + $0x61] sm:$0x1]
    %v48 = vld [vmem:[%s5] sm:$0xff]
    %v49 = vld [vmem:[%s5 + $0x8] sm:$0xff]
    %v50 = vld [vmem:[%s5 + $0x10] sm:$0xff]
    %v51 = vld [vmem:[%s5 + $0x18] sm:$0xff]
    %v52 = vld [vmem:[%s5 + $0x20] sm:$0xff]
    %v53 = vld [vmem:[%s5 + $0x28] sm:$0xff]
    %v54 = vld [vmem:[%s5 + $0x30] sm:$0xff]
    %v55 = vld [vmem:[%s5 + $0x38] sm:$0xff]
    %v56 = vld [vmem:[%s5 + $0x40] sm:$0xff]
    %v57 = vld [vmem:[%s5 + $0x48] sm:$0xff]
    %v58 = vld [vmem:[%s5 + $0x50] sm:$0xff]
    %v59 = vld [vmem:[%s5 + $0x58] sm:$0x1]
    %v60 = vld [vmem:[%s5 + $0x59] sm:$0x1]
    %v61 = vld [vmem:[%s6] sm:$0xff]
    %v62 = vld [vmem:[%s6 + $0x8] sm:$0xff]
    %v63 = vld [vmem:[%s6 + $0x10] sm:$0xff]
    %v64 = vld [vmem:[%s6 + $0x18] sm:$0xff]
    %v65 = vld [vmem:[%s6 + $0x20] sm:$0x1]
    %v66 = vld [vmem:[%s3] sm:$0x3]
    %v67 = vlaneseq
    %v68 = vshrl.u32 %v67, 7
    %v69 = vsub.s32 0, %v68
    %v70 = vrot.slane %v59, %v69
    %vm71 = vcmask 195584
    %v73 = vsel %vm71, %v66, 0
    %75 = vmatprep.subr.mxu0 0.0
    %76 = vmatpush1.msra.mxu0 0.0
    %77 = vmatprep.subr.mxu0 0.0
    %78 = vmatpush1.msra.mxu0 0.0
    %79 = vmatprep.subr.mxu0 0.0
    %80 = vmatpush1.msra.mxu0 0.0
    %81 = vmatprep.subr.mxu0 0.0
    %82 = vmatpush1.msra.mxu0 0.0
    %83 = vmatprep.subr.mxu0 0.0
    %84 = vmatpush1.msra.mxu0 0.0
    %85 = vmatprep.subr.mxu0 0.0
    %86 = vmatpush1.msra.mxu0 0.0
    %87 = vmatprep.subr.mxu0 0.0
    %88 = vmatpush1.msra.mxu0 0.0
    %89 = vmatprep.subr.mxu0 0.0
    %90 = vmatpush1.msra.mxu0 0.0
    %91 = vmatprep.subr.mxu0 0.0
    %92 = vmatpush1.msra.mxu0 0.0
    %93 = vmatprep.subr.mxu0 0.0
    %94 = vmatpush1.msra.mxu0 0.0
    %95 = vmatprep.subr.mxu0 0.0
    %96 = vmatpush1.msra.mxu0 0.0
    %97 = vmatprep.subr.mxu0 0.0
    %98 = vmatpush1.msra.mxu0 0.0
    %99 = vmatprep.subr.mxu0 0.0
    %100 = vmatpush1.msra.mxu0 0.0
    %101 = vmatprep.subr.mxu0 0.0
    %102 = vmatpush1.msra.mxu0 %v58
    %103 = vmatprep.subr.mxu0 0.0
    %104 = vmatpush1.msra.mxu0 %v57
    %105 = vmatprep.subr.mxu0 0.0
    %106 = vmatpush1.msra.mxu0 %v56
    %107 = vmatprep.subr.mxu0 0.0
    %108 = vmatpush2.msra.mxu0 0.0
    %109 = vmatprep.subr.mxu0 0.0
    %110 = vmatpush2.msra.mxu0 0.0
    %111 = vmatprep.subr.mxu0 0.0
    %112 = vmatpush2.msra.mxu0 0.0
    %113 = vmatprep.subr.mxu0 0.0
    %114 = vmatpush2.msra.mxu0 0.0
    %115 = vmatprep.subr.mxu0 0.0
    %116 = vmatpush2.msra.mxu0 0.0
    %117 = vmatprep.subr.mxu0 0.0
    %118 = vmatpush2.msra.mxu0 0.0
    %119 = vmatprep.subr.mxu0 0.0
    %120 = vmatpush2.msra.mxu0 0.0
    %121 = vmatprep.subr.mxu0 0.0
    %122 = vmatpush2.msra.mxu0 0.0
    %123 = vmatprep.subr.mxu0 0.0
    %124 = vmatpush2.msra.mxu0 0.0
    %125 = vmatprep.subr.mxu0 0.0
    %126 = vmatpush2.msra.mxu0 0.0
    %127 = vmatprep.subr.mxu0 0.0
    %128 = vmatpush2.msra.mxu0 0.0
    %129 = vmatprep.subr.mxu0 0.0
    %130 = vmatpush2.msra.mxu0 0.0
    %131 = vmatprep.subr.mxu0 0.0
    %132 = vmatpush2.msra.mxu0 0.0
    %133 = vmatprep.subr.mxu0 0.0
    %134 = vmatpush2.msra.mxu0 0.0
    %135 = vmatprep.subr.mxu0 0.0
    %136 = vmatpush2.msra.mxu0 0.0
    %137 = vmatprep.subr.mxu0 0.0
    %138 = vmatpush2.msra.mxu0 0.0
    %139 = vmatprep.mubr.f32.mxu0 0.0
    %140 = vmatmul.mubr.f32.gmra.mxu0 %v73
    %v141 = vpop.f32.mrf.mxu0
    %v142 = vadd.f32 %v70, %v141
    %v143 = vpop.f32.mrf.mxu0
    %144 = vdwg.mxu0
    %v145 = vmax.f32 %v142, 0.0
    %vm146 = vcmask 254976
    %147 = vst.msk [vmem:[#allocation7] sm:$0x3] %vm146, %v145
    %v148 = vld [vmem:[%s0] sm:$0xff]
    %v149 = vld [vmem:[%s0 + $0x8] sm:$0xff]
    %v150 = vlaneseq
    %v151 = vand.u32 %v150, 127
    %152 = vset.pattern.permute.xlu0 0
    %153 = vperm.xlu0 %152, %v148
    %v154 = vpop.permute.xlu0 %153
    %155 = vset.pattern.permute.xlu0 0
    %156 = vperm.xlu0 %155, %v149
    %v157 = vpop.permute.xlu0 %156
    %vm158 = vcmp.eq.s32.totalorder %v154, %v151
    %vm159 = vcmp.eq.s32.totalorder %v157, %v151
    %v160 = vsel %vm158, 1, 0
    %v161 = vsel %vm159, 1, 0
    %v162 = vcvt.s32.f32 %v160
    %v163 = vcvt.s32.f32 %v161
    %v164 = vlaneseq
    %v165 = vshrl.u32 %v164, 7
    %v166 = vsub.s32 0, %v165
    %v167 = vrot.slane %v46, %v166
    %vm168 = vcmask 523264
    %v170 = vsel %vm168, %v162, 0
    %v173 = vsel %vm168, %v163, 0
    %175 = vmatprep.subr.mxu0 0.0
    %176 = vmatpush1.msra.mxu0 0.0
    %177 = vmatprep.subr.mxu0 0.0
    %178 = vmatpush1.msra.mxu0 0.0
    %179 = vmatprep.subr.mxu0 0.0
    %180 = vmatpush1.msra.mxu0 0.0
    %181 = vmatprep.subr.mxu0 0.0
    %182 = vmatpush1.msra.mxu0 0.0
    %183 = vmatprep.subr.mxu0 0.0
    %184 = vmatpush1.msra.mxu0 0.0
    %185 = vmatprep.subr.mxu0 0.0
    %186 = vmatpush1.msra.mxu0 0.0
    %187 = vmatprep.subr.mxu0 0.0
    %188 = vmatpush1.msra.mxu0 0.0
    %189 = vmatprep.subr.mxu0 0.0
    %190 = vmatpush1.msra.mxu0 0.0
    %191 = vmatprep.subr.mxu0 0.0
    %192 = vmatpush1.msra.mxu0 %v41
    %193 = vmatprep.subr.mxu0 0.0
    %194 = vmatpush1.msra.mxu0 %v40
    %195 = vmatprep.subr.mxu0 0.0
    %196 = vmatpush1.msra.mxu0 %v39
    %197 = vmatprep.subr.mxu0 0.0
    %198 = vmatpush1.msra.mxu0 %v38
    %199 = vmatprep.subr.mxu0 0.0
    %200 = vmatpush1.msra.mxu0 %v37
    %201 = vmatprep.subr.mxu0 0.0
    %202 = vmatpush1.msra.mxu0 %v36
    %203 = vmatprep.subr.mxu0 0.0
    %204 = vmatpush1.msra.mxu0 %v35
    %205 = vmatprep.subr.mxu0 0.0
    %206 = vmatpush1.msra.mxu0 %v34
    %207 = vmatprep.subr.mxu0 0.0
    %208 = vmatpush2.msra.mxu0 0.0
    %209 = vmatprep.subr.mxu0 0.0
    %210 = vmatpush2.msra.mxu0 0.0
    %211 = vmatprep.subr.mxu0 0.0
    %212 = vmatpush2.msra.mxu0 0.0
    %213 = vmatprep.subr.mxu0 0.0
    %214 = vmatpush2.msra.mxu0 0.0
    %215 = vmatprep.subr.mxu0 0.0
    %216 = vmatpush2.msra.mxu0 0.0
    %217 = vmatprep.subr.mxu0 0.0
    %218 = vmatpush2.msra.mxu0 0.0
    %219 = vmatprep.subr.mxu0 0.0
    %220 = vmatpush2.msra.mxu0 0.0
    %221 = vmatprep.subr.mxu0 0.0
    %222 = vmatpush2.msra.mxu0 0.0
    %223 = vmatprep.subr.mxu0 0.0
    %224 = vmatpush2.msra.mxu0 0.0
    %225 = vmatprep.subr.mxu0 0.0
    %226 = vmatpush2.msra.mxu0 0.0
    %227 = vmatprep.subr.mxu0 0.0
    %228 = vmatpush2.msra.mxu0 0.0
    %229 = vmatprep.subr.mxu0 0.0
    %230 = vmatpush2.msra.mxu0 0.0
    %231 = vmatprep.subr.mxu0 0.0
    %232 = vmatpush2.msra.mxu0 0.0
    %233 = vmatprep.subr.mxu0 0.0
    %234 = vmatpush2.msra.mxu0 0.0
    %235 = vmatprep.subr.mxu0 0.0
    %236 = vmatpush2.msra.mxu0 0.0
    %237 = vmatprep.subr.mxu0 0.0
    %238 = vmatpush2.msra.mxu0 0.0
    %239 = vmatprep.mubr.f32.mxu0 0.0
    %240 = vmatmul.mubr.f32.gmra.mxu0 %v170
    %v241 = vpop.f32.mrf.mxu0
    %v242 = vadd.f32 %v167, %v241
    %v243 = vpop.f32.mrf.mxu0
    %244 = vmatprep.mubr.f32.mxu0 0.0
    %245 = vmatmul.mubr.f32.gmra.mxu0 %v173
    %v246 = vpop.f32.mrf.mxu0
    %v247 = vadd.f32 %v167, %v246
    %v248 = vpop.f32.mrf.mxu0
    %249 = vdwg.mxu0
    %v250 = vlaneseq
    %v251 = vshrl.u32 %v250, 7
    %v252 = vsub.s32 0, %v251
    %v253 = vrot.slane %v47, %v252
    %vm254 = vcmask 261120
    %v256 = vsel %vm254, %v145, 0
    %258 = vmatprep.subr.mxu0 0.0
    %259 = vmatpush1.msra.mxu0 0.0
    %260 = vmatprep.subr.mxu0 0.0
    %261 = vmatpush1.msra.mxu0 0.0
    %262 = vmatprep.subr.mxu0 0.0
    %263 = vmatpush1.msra.mxu0 0.0
    %264 = vmatprep.subr.mxu0 0.0
    %265 = vmatpush1.msra.mxu0 0.0
    %266 = vmatprep.subr.mxu0 0.0
    %267 = vmatpush1.msra.mxu0 0.0
    %268 = vmatprep.subr.mxu0 0.0
    %269 = vmatpush1.msra.mxu0 0.0
    %270 = vmatprep.subr.mxu0 0.0
    %271 = vmatpush1.msra.mxu0 0.0
    %272 = vmatprep.subr.mxu0 0.0
    %273 = vmatpush1.msra.mxu0 0.0
    %274 = vmatprep.subr.mxu0 0.0
    %275 = vmatpush1.msra.mxu0 0.0
    %276 = vmatprep.subr.mxu0 0.0
    %277 = vmatpush1.msra.mxu0 0.0
    %278 = vmatprep.subr.mxu0 0.0
    %279 = vmatpush1.msra.mxu0 0.0
    %280 = vmatprep.subr.mxu0 0.0
    %281 = vmatpush1.msra.mxu0 0.0
    %282 = vmatprep.subr.mxu0 0.0
    %283 = vmatpush1.msra.mxu0 %v45
    %284 = vmatprep.subr.mxu0 0.0
    %285 = vmatpush1.msra.mxu0 %v44
    %286 = vmatprep.subr.mxu0 0.0
    %287 = vmatpush1.msra.mxu0 %v43
    %288 = vmatprep.subr.mxu0 0.0
    %289 = vmatpush1.msra.mxu0 %v42
    %290 = vmatprep.subr.mxu0 0.0
    %291 = vmatpush2.msra.mxu0 0.0
    %292 = vmatprep.subr.mxu0 0.0
    %293 = vmatpush2.msra.mxu0 0.0
    %294 = vmatprep.subr.mxu0 0.0
    %295 = vmatpush2.msra.mxu0 0.0
    %296 = vmatprep.subr.mxu0 0.0
    %297 = vmatpush2.msra.mxu0 0.0
    %298 = vmatprep.subr.mxu0 0.0
    %299 = vmatpush2.msra.mxu0 0.0
    %300 = vmatprep.subr.mxu0 0.0
    %301 = vmatpush2.msra.mxu0 0.0
    %302 = vmatprep.subr.mxu0 0.0
    %303 = vmatpush2.msra.mxu0 0.0
    %304 = vmatprep.subr.mxu0 0.0
    %305 = vmatpush2.msra.mxu0 0.0
    %306 = vmatprep.subr.mxu0 0.0
    %307 = vmatpush2.msra.mxu0 0.0
    %308 = vmatprep.subr.mxu0 0.0
    %309 = vmatpush2.msra.mxu0 0.0
    %310 = vmatprep.subr.mxu0 0.0
    %311 = vmatpush2.msra.mxu0 0.0
    %312 = vmatprep.subr.mxu0 0.0
    %313 = vmatpush2.msra.mxu0 0.0
    %314 = vmatprep.subr.mxu0 0.0
    %315 = vmatpush2.msra.mxu0 0.0
    %316 = vmatprep.subr.mxu0 0.0
    %317 = vmatpush2.msra.mxu0 0.0
    %318 = vmatprep.subr.mxu0 0.0
    %319 = vmatpush2.msra.mxu0 0.0
    %320 = vmatprep.subr.mxu0 0.0
    %321 = vmatpush2.msra.mxu0 0.0
    %322 = vmatprep.mubr.f32.mxu0 0.0
    %323 = vmatmul.mubr.f32.gmra.mxu0 %v256
    %v324 = vpop.f32.mrf.mxu0
    %v325 = vadd.f32 %v253, %v324
    %v326 = vpop.f32.mrf.mxu0
    %327 = vdwg.mxu0
    %v328 = vadd.f32 %v242, %v325
    %v329 = vxor.u32 %v328, 2147483648
    %v330 = vmul.f32 %v329, 1.442695
    %v331 = vpow.pop %v330
    %v332 = vadd.f32 %v331, 1.0
    %v333 = vrcp.pop %v332
    %v334 = vmul.f32 1.0, %v333
    %336 = vrot.lane.b32.xlu0 %v325, 64
    %v337 = vpop.permute.xlu0 %336
    %v339 = vmul.f32 %v334, %v337
    %341 = vrot.lane.b32.xlu0 %v339, 64
    %v342 = vpop.permute.xlu0 %341
    %v344 = vadd.f32 %v242, %v342
    %v345 = vtanh.pop %v344
    %v346 = vsub.f32 1.0, %v334
    %348 = vrot.lane.b32.xlu0 %v345, 96
    %v349 = vpop.permute.xlu0 %348
    %v351 = vmul.f32 %v346, %v349
    %352 = vrot.lane.b32.xlu0 %v145, 32
    %v353 = vpop.permute.xlu0 %352
    %v355 = vmul.f32 %v334, %v353
    %v356 = vadd.f32 %v351, %v355
    %358 = vrot.lane.b32.xlu0 %v356, 96
    %v359 = vpop.permute.xlu0 %358
    %v360 = vsel %vm254, %v359, 0
    %362 = vmatprep.subr.mxu0 0.0
    %363 = vmatpush1.msra.mxu0 0.0
    %364 = vmatprep.subr.mxu0 0.0
    %365 = vmatpush1.msra.mxu0 0.0
    %366 = vmatprep.subr.mxu0 0.0
    %367 = vmatpush1.msra.mxu0 0.0
    %368 = vmatprep.subr.mxu0 0.0
    %369 = vmatpush1.msra.mxu0 0.0
    %370 = vmatprep.subr.mxu0 0.0
    %371 = vmatpush1.msra.mxu0 0.0
    %372 = vmatprep.subr.mxu0 0.0
    %373 = vmatpush1.msra.mxu0 0.0
    %374 = vmatprep.subr.mxu0 0.0
    %375 = vmatpush1.msra.mxu0 0.0
    %376 = vmatprep.subr.mxu0 0.0
    %377 = vmatpush1.msra.mxu0 0.0
    %378 = vmatprep.subr.mxu0 0.0
    %379 = vmatpush1.msra.mxu0 0.0
    %380 = vmatprep.subr.mxu0 0.0
    %381 = vmatpush1.msra.mxu0 0.0
    %382 = vmatprep.subr.mxu0 0.0
    %383 = vmatpush1.msra.mxu0 0.0
    %384 = vmatprep.subr.mxu0 0.0
    %385 = vmatpush1.msra.mxu0 0.0
    %386 = vmatprep.subr.mxu0 0.0
    %387 = vmatpush1.msra.mxu0 %v45
    %388 = vmatprep.subr.mxu0 0.0
    %389 = vmatpush1.msra.mxu0 %v44
    %390 = vmatprep.subr.mxu0 0.0
    %391 = vmatpush1.msra.mxu0 %v43
    %392 = vmatprep.subr.mxu0 0.0
    %393 = vmatpush1.msra.mxu0 %v42
    %394 = vmatprep.subr.mxu0 0.0
    %395 = vmatpush2.msra.mxu0 0.0
    %396 = vmatprep.subr.mxu0 0.0
    %397 = vmatpush2.msra.mxu0 0.0
    %398 = vmatprep.subr.mxu0 0.0
    %399 = vmatpush2.msra.mxu0 0.0
    %400 = vmatprep.subr.mxu0 0.0
    %401 = vmatpush2.msra.mxu0 0.0
    %402 = vmatprep.subr.mxu0 0.0
    %403 = vmatpush2.msra.mxu0 0.0
    %404 = vmatprep.subr.mxu0 0.0
    %405 = vmatpush2.msra.mxu0 0.0
    %406 = vmatprep.subr.mxu0 0.0
    %407 = vmatpush2.msra.mxu0 0.0
    %408 = vmatprep.subr.mxu0 0.0
    %409 = vmatpush2.msra.mxu0 0.0
    %410 = vmatprep.subr.mxu0 0.0
    %411 = vmatpush2.msra.mxu0 0.0
    %412 = vmatprep.subr.mxu0 0.0
    %413 = vmatpush2.msra.mxu0 0.0
    %414 = vmatprep.subr.mxu0 0.0
    %415 = vmatpush2.msra.mxu0 0.0
    %416 = vmatprep.subr.mxu0 0.0
    %417 = vmatpush2.msra.mxu0 0.0
    %418 = vmatprep.subr.mxu0 0.0
    %419 = vmatpush2.msra.mxu0 0.0
    %420 = vmatprep.subr.mxu0 0.0
    %421 = vmatpush2.msra.mxu0 0.0
    %422 = vmatprep.subr.mxu0 0.0
    %423 = vmatpush2.msra.mxu0 0.0
    %424 = vmatprep.subr.mxu0 0.0
    %425 = vmatpush2.msra.mxu0 0.0
    %426 = vmatprep.mubr.f32.mxu0 0.0
    %427 = vmatmul.mubr.f32.gmra.mxu0 %v360
    %v428 = vpop.f32.mrf.mxu0
    %v429 = vadd.f32 %v253, %v428
    %v430 = vpop.f32.mrf.mxu0
    %431 = vdwg.mxu0
    %v433 = vrot.slane %v429, 6
    %v435 = vadd.f32 %v242, %v433
    %v436 = vxor.u32 %v435, 2147483648
    %v437 = vmul.f32 %v436, 1.442695
    %v438 = vpow.pop %v437
    %v439 = vadd.f32 %v438, 1.0
    %v440 = vrcp.pop %v439
    %v441 = vmul.f32 1.0, %v440
    %442 = vrot.lane.b32.xlu0 %v433, 64
    %v443 = vpop.permute.xlu0 %442
    %v445 = vmul.f32 %v441, %v443
    %447 = vrot.lane.b32.xlu0 %v445, 64
    %v448 = vpop.permute.xlu0 %447
    %v450 = vadd.f32 %v242, %v448
    %v451 = vtanh.pop %v450
    %v452 = vsub.f32 1.0, %v441
    %454 = vrot.lane.b32.xlu0 %v451, 96
    %v455 = vpop.permute.xlu0 %454
    %v457 = vmul.f32 %v452, %v455
    %v458 = vrot.slane %v356, 6
    %v460 = vmul.f32 %v441, %v458
    %v461 = vadd.f32 %v457, %v460
    %v463 = vrot.slane %v461, 2
    %464 = vrot.lane.b32.xlu0 %v463, 96
    %v465 = vpop.permute.xlu0 %464
    %v466 = vsel %vm254, %v465, 0
    %468 = vmatprep.subr.mxu0 0.0
    %469 = vmatpush1.msra.mxu0 0.0
    %470 = vmatprep.subr.mxu0 0.0
    %471 = vmatpush1.msra.mxu0 0.0
    %472 = vmatprep.subr.mxu0 0.0
    %473 = vmatpush1.msra.mxu0 0.0
    %474 = vmatprep.subr.mxu0 0.0
    %475 = vmatpush1.msra.mxu0 0.0
    %476 = vmatprep.subr.mxu0 0.0
    %477 = vmatpush1.msra.mxu0 0.0
    %478 = vmatprep.subr.mxu0 0.0
    %479 = vmatpush1.msra.mxu0 0.0
    %480 = vmatprep.subr.mxu0 0.0
    %481 = vmatpush1.msra.mxu0 0.0
    %482 = vmatprep.subr.mxu0 0.0
    %483 = vmatpush1.msra.mxu0 0.0
    %484 = vmatprep.subr.mxu0 0.0
    %485 = vmatpush1.msra.mxu0 0.0
    %486 = vmatprep.subr.mxu0 0.0
    %487 = vmatpush1.msra.mxu0 0.0
    %488 = vmatprep.subr.mxu0 0.0
    %489 = vmatpush1.msra.mxu0 0.0
    %490 = vmatprep.subr.mxu0 0.0
    %491 = vmatpush1.msra.mxu0 0.0
    %492 = vmatprep.subr.mxu0 0.0
    %493 = vmatpush1.msra.mxu0 %v45
    %494 = vmatprep.subr.mxu0 0.0
    %495 = vmatpush1.msra.mxu0 %v44
    %496 = vmatprep.subr.mxu0 0.0
    %497 = vmatpush1.msra.mxu0 %v43
    %498 = vmatprep.subr.mxu0 0.0
    %499 = vmatpush1.msra.mxu0 %v42
    %500 = vmatprep.subr.mxu0 0.0
    %501 = vmatpush2.msra.mxu0 0.0
    %502 = vmatprep.subr.mxu0 0.0
    %503 = vmatpush2.msra.mxu0 0.0
    %504 = vmatprep.subr.mxu0 0.0
    %505 = vmatpush2.msra.mxu0 0.0
    %506 = vmatprep.subr.mxu0 0.0
    %507 = vmatpush2.msra.mxu0 0.0
    %508 = vmatprep.subr.mxu0 0.0
    %509 = vmatpush2.msra.mxu0 0.0
    %510 = vmatprep.subr.mxu0 0.0
    %511 = vmatpush2.msra.mxu0 0.0
    %512 = vmatprep.subr.mxu0 0.0
    %513 = vmatpush2.msra.mxu0 0.0
    %514 = vmatprep.subr.mxu0 0.0
    %515 = vmatpush2.msra.mxu0 0.0
    %516 = vmatprep.subr.mxu0 0.0
    %517 = vmatpush2.msra.mxu0 0.0
    %518 = vmatprep.subr.mxu0 0.0
    %519 = vmatpush2.msra.mxu0 0.0
    %520 = vmatprep.subr.mxu0 0.0
    %521 = vmatpush2.msra.mxu0 0.0
    %522 = vmatprep.subr.mxu0 0.0
    %523 = vmatpush2.msra.mxu0 0.0
    %524 = vmatprep.subr.mxu0 0.0
    %525 = vmatpush2.msra.mxu0 0.0
    %526 = vmatprep.subr.mxu0 0.0
    %527 = vmatpush2.msra.mxu0 0.0
    %528 = vmatprep.subr.mxu0 0.0
    %529 = vmatpush2.msra.mxu0 0.0
    %530 = vmatprep.subr.mxu0 0.0
    %531 = vmatpush2.msra.mxu0 0.0
    %532 = vmatprep.mubr.f32.mxu0 0.0
    %533 = vmatmul.mubr.f32.gmra.mxu0 %v466
    %v534 = vpop.f32.mrf.mxu0
    %v535 = vadd.f32 %v253, %v534
    %v536 = vpop.f32.mrf.mxu0
    %537 = vdwg.mxu0
    %v539 = vrot.slane %v535, 4
    %v541 = vadd.f32 %v242, %v539
    %v542 = vxor.u32 %v541, 2147483648
    %v543 = vmul.f32 %v542, 1.442695
    %v544 = vpow.pop %v543
    %v545 = vadd.f32 %v544, 1.0
    %v546 = vrcp.pop %v545
    %v547 = vmul.f32 1.0, %v546
    %548 = vrot.lane.b32.xlu0 %v539, 64
    %v549 = vpop.permute.xlu0 %548
    %v551 = vmul.f32 %v547, %v549
    %553 = vrot.lane.b32.xlu0 %v551, 64
    %v554 = vpop.permute.xlu0 %553
    %v556 = vadd.f32 %v242, %v554
    %v557 = vtanh.pop %v556
    %v558 = vsub.f32 1.0, %v547
    %560 = vrot.lane.b32.xlu0 %v557, 96
    %v561 = vpop.permute.xlu0 %560
    %v563 = vmul.f32 %v558, %v561
    %v564 = vrot.slane %v461, 6
    %v566 = vmul.f32 %v547, %v564
    %v567 = vadd.f32 %v563, %v566
    %v569 = vrot.slane %v567, 4
    %570 = vrot.lane.b32.xlu0 %v569, 96
    %v571 = vpop.permute.xlu0 %570
    %v572 = vsel %vm254, %v571, 0
    %574 = vmatprep.subr.mxu0 0.0
    %575 = vmatpush1.msra.mxu0 0.0
    %576 = vmatprep.subr.mxu0 0.0
    %577 = vmatpush1.msra.mxu0 0.0
    %578 = vmatprep.subr.mxu0 0.0
    %579 = vmatpush1.msra.mxu0 0.0
    %580 = vmatprep.subr.mxu0 0.0
    %581 = vmatpush1.msra.mxu0 0.0
    %582 = vmatprep.subr.mxu0 0.0
    %583 = vmatpush1.msra.mxu0 0.0
    %584 = vmatprep.subr.mxu0 0.0
    %585 = vmatpush1.msra.mxu0 0.0
    %586 = vmatprep.subr.mxu0 0.0
    %587 = vmatpush1.msra.mxu0 0.0
    %588 = vmatprep.subr.mxu0 0.0
    %589 = vmatpush1.msra.mxu0 0.0
    %590 = vmatprep.subr.mxu0 0.0
    %591 = vmatpush1.msra.mxu0 0.0
    %592 = vmatprep.subr.mxu0 0.0
    %593 = vmatpush1.msra.mxu0 0.0
    %594 = vmatprep.subr.mxu0 0.0
    %595 = vmatpush1.msra.mxu0 0.0
    %596 = vmatprep.subr.mxu0 0.0
    %597 = vmatpush1.msra.mxu0 0.0
    %598 = vmatprep.subr.mxu0 0.0
    %599 = vmatpush1.msra.mxu0 %v45
    %600 = vmatprep.subr.mxu0 0.0
    %601 = vmatpush1.msra.mxu0 %v44
    %602 = vmatprep.subr.mxu0 0.0
    %603 = vmatpush1.msra.mxu0 %v43
    %604 = vmatprep.subr.mxu0 0.0
    %605 = vmatpush1.msra.mxu0 %v42
    %606 = vmatprep.subr.mxu0 0.0
    %607 = vmatpush2.msra.mxu0 0.0
    %608 = vmatprep.subr.mxu0 0.0
    %609 = vmatpush2.msra.mxu0 0.0
    %610 = vmatprep.subr.mxu0 0.0
    %611 = vmatpush2.msra.mxu0 0.0
    %612 = vmatprep.subr.mxu0 0.0
    %613 = vmatpush2.msra.mxu0 0.0
    %614 = vmatprep.subr.mxu0 0.0
    %615 = vmatpush2.msra.mxu0 0.0
    %616 = vmatprep.subr.mxu0 0.0
    %617 = vmatpush2.msra.mxu0 0.0
    %618 = vmatprep.subr.mxu0 0.0
    %619 = vmatpush2.msra.mxu0 0.0
    %620 = vmatprep.subr.mxu0 0.0
    %621 = vmatpush2.msra.mxu0 0.0
    %622 = vmatprep.subr.mxu0 0.0
    %623 = vmatpush2.msra.mxu0 0.0
    %624 = vmatprep.subr.mxu0 0.0
    %625 = vmatpush2.msra.mxu0 0.0
    %626 = vmatprep.subr.mxu0 0.0
    %627 = vmatpush2.msra.mxu0 0.0
    %628 = vmatprep.subr.mxu0 0.0
    %629 = vmatpush2.msra.mxu0 0.0
    %630 = vmatprep.subr.mxu0 0.0
    %631 = vmatpush2.msra.mxu0 0.0
    %632 = vmatprep.subr.mxu0 0.0
    %633 = vmatpush2.msra.mxu0 0.0
    %634 = vmatprep.subr.mxu0 0.0
    %635 = vmatpush2.msra.mxu0 0.0
    %636 = vmatprep.subr.mxu0 0.0
    %637 = vmatpush2.msra.mxu0 0.0
    %638 = vmatprep.mubr.f32.mxu0 0.0
    %639 = vmatmul.mubr.f32.gmra.mxu0 %v572
    %v640 = vpop.f32.mrf.mxu0
    %v641 = vadd.f32 %v253, %v640
    %v642 = vpop.f32.mrf.mxu0
    %643 = vdwg.mxu0
    %v645 = vrot.slane %v641, 2
    %v647 = vadd.f32 %v242, %v645
    %v648 = vxor.u32 %v647, 2147483648
    %v649 = vmul.f32 %v648, 1.442695
    %v650 = vpow.pop %v649
    %v651 = vadd.f32 %v650, 1.0
    %v652 = vrcp.pop %v651
    %v653 = vmul.f32 1.0, %v652
    %654 = vrot.lane.b32.xlu0 %v645, 64
    %v655 = vpop.permute.xlu0 %654
    %v657 = vmul.f32 %v653, %v655
    %659 = vrot.lane.b32.xlu0 %v657, 64
    %v660 = vpop.permute.xlu0 %659
    %v662 = vadd.f32 %v242, %v660
    %v663 = vtanh.pop %v662
    %v664 = vsub.f32 1.0, %v653
    %666 = vrot.lane.b32.xlu0 %v663, 96
    %v667 = vpop.permute.xlu0 %666
    %v669 = vmul.f32 %v664, %v667
    %v670 = vrot.slane %v567, 6
    %v672 = vmul.f32 %v653, %v670
    %v673 = vadd.f32 %v669, %v672
    %v675 = vrot.slane %v673, 6
    %676 = vrot.lane.b32.xlu0 %v675, 96
    %v677 = vpop.permute.xlu0 %676
    %v678 = vsel %vm254, %v677, 0
    %680 = vmatprep.subr.mxu0 0.0
    %681 = vmatpush1.msra.mxu0 0.0
    %682 = vmatprep.subr.mxu0 0.0
    %683 = vmatpush1.msra.mxu0 0.0
    %684 = vmatprep.subr.mxu0 0.0
    %685 = vmatpush1.msra.mxu0 0.0
    %686 = vmatprep.subr.mxu0 0.0
    %687 = vmatpush1.msra.mxu0 0.0
    %688 = vmatprep.subr.mxu0 0.0
    %689 = vmatpush1.msra.mxu0 0.0
    %690 = vmatprep.subr.mxu0 0.0
    %691 = vmatpush1.msra.mxu0 0.0
    %692 = vmatprep.subr.mxu0 0.0
    %693 = vmatpush1.msra.mxu0 0.0
    %694 = vmatprep.subr.mxu0 0.0
    %695 = vmatpush1.msra.mxu0 0.0
    %696 = vmatprep.subr.mxu0 0.0
    %697 = vmatpush1.msra.mxu0 0.0
    %698 = vmatprep.subr.mxu0 0.0
    %699 = vmatpush1.msra.mxu0 0.0
    %700 = vmatprep.subr.mxu0 0.0
    %701 = vmatpush1.msra.mxu0 0.0
    %702 = vmatprep.subr.mxu0 0.0
    %703 = vmatpush1.msra.mxu0 0.0
    %704 = vmatprep.subr.mxu0 0.0
    %705 = vmatpush1.msra.mxu0 %v45
    %706 = vmatprep.subr.mxu0 0.0
    %707 = vmatpush1.msra.mxu0 %v44
    %708 = vmatprep.subr.mxu0 0.0
    %709 = vmatpush1.msra.mxu0 %v43
    %710 = vmatprep.subr.mxu0 0.0
    %711 = vmatpush1.msra.mxu0 %v42
    %712 = vmatprep.subr.mxu0 0.0
    %713 = vmatpush2.msra.mxu0 0.0
    %714 = vmatprep.subr.mxu0 0.0
    %715 = vmatpush2.msra.mxu0 0.0
    %716 = vmatprep.subr.mxu0 0.0
    %717 = vmatpush2.msra.mxu0 0.0
    %718 = vmatprep.subr.mxu0 0.0
    %719 = vmatpush2.msra.mxu0 0.0
    %720 = vmatprep.subr.mxu0 0.0
    %721 = vmatpush2.msra.mxu0 0.0
    %722 = vmatprep.subr.mxu0 0.0
    %723 = vmatpush2.msra.mxu0 0.0
    %724 = vmatprep.subr.mxu0 0.0
    %725 = vmatpush2.msra.mxu0 0.0
    %726 = vmatprep.subr.mxu0 0.0
    %727 = vmatpush2.msra.mxu0 0.0
    %728 = vmatprep.subr.mxu0 0.0
    %729 = vmatpush2.msra.mxu0 0.0
    %730 = vmatprep.subr.mxu0 0.0
    %731 = vmatpush2.msra.mxu0 0.0
    %732 = vmatprep.subr.mxu0 0.0
    %733 = vmatpush2.msra.mxu0 0.0
    %734 = vmatprep.subr.mxu0 0.0
    %735 = vmatpush2.msra.mxu0 0.0
    %736 = vmatprep.subr.mxu0 0.0
    %737 = vmatpush2.msra.mxu0 0.0
    %738 = vmatprep.subr.mxu0 0.0
    %739 = vmatpush2.msra.mxu0 0.0
    %740 = vmatprep.subr.mxu0 0.0
    %741 = vmatpush2.msra.mxu0 0.0
    %742 = vmatprep.subr.mxu0 0.0
    %743 = vmatpush2.msra.mxu0 0.0
    %744 = vmatprep.mubr.f32.mxu0 0.0
    %745 = vmatmul.mubr.f32.gmra.mxu0 %v678
    %v746 = vpop.f32.mrf.mxu0
    %v747 = vadd.f32 %v253, %v746
    %v748 = vpop.f32.mrf.mxu0
    %749 = vdwg.mxu0
    %v750 = vadd.f32 %v247, %v747
    %v751 = vxor.u32 %v750, 2147483648
    %v752 = vmul.f32 %v751, 1.442695
    %v753 = vpow.pop %v752
    %v754 = vadd.f32 %v753, 1.0
    %v755 = vrcp.pop %v754
    %v756 = vmul.f32 1.0, %v755
    %758 = vrot.lane.b32.xlu0 %v747, 64
    %v759 = vpop.permute.xlu0 %758
    %v761 = vmul.f32 %v756, %v759
    %763 = vrot.lane.b32.xlu0 %v761, 64
    %v764 = vpop.permute.xlu0 %763
    %v766 = vadd.f32 %v247, %v764
    %v767 = vtanh.pop %v766
    %v768 = vsub.f32 1.0, %v756
    %770 = vrot.lane.b32.xlu0 %v767, 96
    %v771 = vpop.permute.xlu0 %770
    %v773 = vmul.f32 %v768, %v771
    %v775 = vmul.f32 %v756, %v675
    %v776 = vadd.f32 %v773, %v775
    %778 = vrot.lane.b32.xlu0 %v776, 96
    %v779 = vpop.permute.xlu0 %778
    %v780 = vsel %vm254, %v779, 0
    %782 = vmatprep.subr.mxu0 0.0
    %783 = vmatpush1.msra.mxu0 0.0
    %784 = vmatprep.subr.mxu0 0.0
    %785 = vmatpush1.msra.mxu0 0.0
    %786 = vmatprep.subr.mxu0 0.0
    %787 = vmatpush1.msra.mxu0 0.0
    %788 = vmatprep.subr.mxu0 0.0
    %789 = vmatpush1.msra.mxu0 0.0
    %790 = vmatprep.subr.mxu0 0.0
    %791 = vmatpush1.msra.mxu0 0.0
    %792 = vmatprep.subr.mxu0 0.0
    %793 = vmatpush1.msra.mxu0 0.0
    %794 = vmatprep.subr.mxu0 0.0
    %795 = vmatpush1.msra.mxu0 0.0
    %796 = vmatprep.subr.mxu0 0.0
    %797 = vmatpush1.msra.mxu0 0.0
    %798 = vmatprep.subr.mxu0 0.0
    %799 = vmatpush1.msra.mxu0 0.0
    %800 = vmatprep.subr.mxu0 0.0
    %801 = vmatpush1.msra.mxu0 0.0
    %802 = vmatprep.subr.mxu0 0.0
    %803 = vmatpush1.msra.mxu0 0.0
    %804 = vmatprep.subr.mxu0 0.0
    %805 = vmatpush1.msra.mxu0 0.0
    %806 = vmatprep.subr.mxu0 0.0
    %807 = vmatpush1.msra.mxu0 %v45
    %808 = vmatprep.subr.mxu0 0.0
    %809 = vmatpush1.msra.mxu0 %v44
    %810 = vmatprep.subr.mxu0 0.0
    %811 = vmatpush1.msra.mxu0 %v43
    %812 = vmatprep.subr.mxu0 0.0
    %813 = vmatpush1.msra.mxu0 %v42
    %814 = vmatprep.subr.mxu0 0.0
    %815 = vmatpush2.msra.mxu0 0.0
    %816 = vmatprep.subr.mxu0 0.0
    %817 = vmatpush2.msra.mxu0 0.0
    %818 = vmatprep.subr.mxu0 0.0
    %819 = vmatpush2.msra.mxu0 0.0
    %820 = vmatprep.subr.mxu0 0.0
    %821 = vmatpush2.msra.mxu0 0.0
    %822 = vmatprep.subr.mxu0 0.0
    %823 = vmatpush2.msra.mxu0 0.0
    %824 = vmatprep.subr.mxu0 0.0
    %825 = vmatpush2.msra.mxu0 0.0
    %826 = vmatprep.subr.mxu0 0.0
    %827 = vmatpush2.msra.mxu0 0.0
    %828 = vmatprep.subr.mxu0 0.0
    %829 = vmatpush2.msra.mxu0 0.0
    %830 = vmatprep.subr.mxu0 0.0
    %831 = vmatpush2.msra.mxu0 0.0
    %832 = vmatprep.subr.mxu0 0.0
    %833 = vmatpush2.msra.mxu0 0.0
    %834 = vmatprep.subr.mxu0 0.0
    %835 = vmatpush2.msra.mxu0 0.0
    %836 = vmatprep.subr.mxu0 0.0
    %837 = vmatpush2.msra.mxu0 0.0
    %838 = vmatprep.subr.mxu0 0.0
    %839 = vmatpush2.msra.mxu0 0.0
    %840 = vmatprep.subr.mxu0 0.0
    %841 = vmatpush2.msra.mxu0 0.0
    %842 = vmatprep.subr.mxu0 0.0
    %843 = vmatpush2.msra.mxu0 0.0
    %844 = vmatprep.subr.mxu0 0.0
    %845 = vmatpush2.msra.mxu0 0.0
    %846 = vmatprep.mubr.f32.mxu0 0.0
    %847 = vmatmul.mubr.f32.gmra.mxu0 %v780
    %v848 = vpop.f32.mrf.mxu0
    %v849 = vadd.f32 %v253, %v848
    %v850 = vpop.f32.mrf.mxu0
    %851 = vdwg.mxu0
    %v853 = vrot.slane %v849, 6
    %v855 = vadd.f32 %v247, %v853
    %v856 = vxor.u32 %v855, 2147483648
    %v857 = vmul.f32 %v856, 1.442695
    %v858 = vpow.pop %v857
    %v859 = vadd.f32 %v858, 1.0
    %v860 = vrcp.pop %v859
    %v861 = vmul.f32 1.0, %v860
    %862 = vrot.lane.b32.xlu0 %v853, 64
    %v863 = vpop.permute.xlu0 %862
    %v865 = vmul.f32 %v861, %v863
    %867 = vrot.lane.b32.xlu0 %v865, 64
    %v868 = vpop.permute.xlu0 %867
    %v870 = vadd.f32 %v247, %v868
    %v871 = vtanh.pop %v870
    %v872 = vsub.f32 1.0, %v861
    %874 = vrot.lane.b32.xlu0 %v871, 96
    %v875 = vpop.permute.xlu0 %874
    %v877 = vmul.f32 %v872, %v875
    %v878 = vrot.slane %v776, 6
    %v880 = vmul.f32 %v861, %v878
    %v881 = vadd.f32 %v877, %v880
    %v883 = vrot.slane %v881, 2
    %884 = vrot.lane.b32.xlu0 %v883, 96
    %v885 = vpop.permute.xlu0 %884
    %v886 = vsel %vm254, %v885, 0
    %888 = vmatprep.subr.mxu0 0.0
    %889 = vmatpush1.msra.mxu0 0.0
    %890 = vmatprep.subr.mxu0 0.0
    %891 = vmatpush1.msra.mxu0 0.0
    %892 = vmatprep.subr.mxu0 0.0
    %893 = vmatpush1.msra.mxu0 0.0
    %894 = vmatprep.subr.mxu0 0.0
    %895 = vmatpush1.msra.mxu0 0.0
    %896 = vmatprep.subr.mxu0 0.0
    %897 = vmatpush1.msra.mxu0 0.0
    %898 = vmatprep.subr.mxu0 0.0
    %899 = vmatpush1.msra.mxu0 0.0
    %900 = vmatprep.subr.mxu0 0.0
    %901 = vmatpush1.msra.mxu0 0.0
    %902 = vmatprep.subr.mxu0 0.0
    %903 = vmatpush1.msra.mxu0 0.0
    %904 = vmatprep.subr.mxu0 0.0
    %905 = vmatpush1.msra.mxu0 0.0
    %906 = vmatprep.subr.mxu0 0.0
    %907 = vmatpush1.msra.mxu0 0.0
    %908 = vmatprep.subr.mxu0 0.0
    %909 = vmatpush1.msra.mxu0 0.0
    %910 = vmatprep.subr.mxu0 0.0
    %911 = vmatpush1.msra.mxu0 0.0
    %912 = vmatprep.subr.mxu0 0.0
    %913 = vmatpush1.msra.mxu0 %v45
    %914 = vmatprep.subr.mxu0 0.0
    %915 = vmatpush1.msra.mxu0 %v44
    %916 = vmatprep.subr.mxu0 0.0
    %917 = vmatpush1.msra.mxu0 %v43
    %918 = vmatprep.subr.mxu0 0.0
    %919 = vmatpush1.msra.mxu0 %v42
    %920 = vmatprep.subr.mxu0 0.0
    %921 = vmatpush2.msra.mxu0 0.0
    %922 = vmatprep.subr.mxu0 0.0
    %923 = vmatpush2.msra.mxu0 0.0
    %924 = vmatprep.subr.mxu0 0.0
    %925 = vmatpush2.msra.mxu0 0.0
    %926 = vmatprep.subr.mxu0 0.0
    %927 = vmatpush2.msra.mxu0 0.0
    %928 = vmatprep.subr.mxu0 0.0
    %929 = vmatpush2.msra.mxu0 0.0
    %930 = vmatprep.subr.mxu0 0.0
    %931 = vmatpush2.msra.mxu0 0.0
    %932 = vmatprep.subr.mxu0 0.0
    %933 = vmatpush2.msra.mxu0 0.0
    %934 = vmatprep.subr.mxu0 0.0
    %935 = vmatpush2.msra.mxu0 0.0
    %936 = vmatprep.subr.mxu0 0.0
    %937 = vmatpush2.msra.mxu0 0.0
    %938 = vmatprep.subr.mxu0 0.0
    %939 = vmatpush2.msra.mxu0 0.0
    %940 = vmatprep.subr.mxu0 0.0
    %941 = vmatpush2.msra.mxu0 0.0
    %942 = vmatprep.subr.mxu0 0.0
    %943 = vmatpush2.msra.mxu0 0.0
    %944 = vmatprep.subr.mxu0 0.0
    %945 = vmatpush2.msra.mxu0 0.0
    %946 = vmatprep.subr.mxu0 0.0
    %947 = vmatpush2.msra.mxu0 0.0
    %948 = vmatprep.subr.mxu0 0.0
    %949 = vmatpush2.msra.mxu0 0.0
    %950 = vmatprep.subr.mxu0 0.0
    %951 = vmatpush2.msra.mxu0 0.0
    %952 = vmatprep.mubr.f32.mxu0 0.0
    %953 = vmatmul.mubr.f32.gmra.mxu0 %v886
    %v954 = vpop.f32.mrf.mxu0
    %v955 = vadd.f32 %v253, %v954
    %v956 = vpop.f32.mrf.mxu0
    %957 = vdwg.mxu0
    %v959 = vrot.slane %v955, 4
    %v961 = vadd.f32 %v247, %v959
    %v962 = vxor.u32 %v961, 2147483648
    %v963 = vmul.f32 %v962, 1.442695
    %v964 = vpow.pop %v963
    %v965 = vadd.f32 %v964, 1.0
    %v966 = vrcp.pop %v965
    %v967 = vmul.f32 1.0, %v966
    %968 = vrot.lane.b32.xlu0 %v959, 64
    %v969 = vpop.permute.xlu0 %968
    %v971 = vmul.f32 %v967, %v969
    %973 = vrot.lane.b32.xlu0 %v971, 64
    %v974 = vpop.permute.xlu0 %973
    %v976 = vadd.f32 %v247, %v974
    %v977 = vtanh.pop %v976
    %v978 = vsub.f32 1.0, %v967
    %980 = vrot.lane.b32.xlu0 %v977, 96
    %v981 = vpop.permute.xlu0 %980
    %v983 = vmul.f32 %v978, %v981
    %v984 = vrot.slane %v881, 6
    %v986 = vmul.f32 %v967, %v984
    %v987 = vadd.f32 %v983, %v986
    %v989 = vrot.slane %v987, 4
    %990 = vrot.lane.b32.xlu0 %v989, 96
    %v991 = vpop.permute.xlu0 %990
    %v992 = vsel %vm254, %v991, 0
    %994 = vmatprep.subr.mxu0 0.0
    %995 = vmatpush1.msra.mxu0 0.0
    %996 = vmatprep.subr.mxu0 0.0
    %997 = vmatpush1.msra.mxu0 0.0
    %998 = vmatprep.subr.mxu0 0.0
    %999 = vmatpush1.msra.mxu0 0.0
    %1000 = vmatprep.subr.mxu0 0.0
    %1001 = vmatpush1.msra.mxu0 0.0
    %1002 = vmatprep.subr.mxu0 0.0
    %1003 = vmatpush1.msra.mxu0 0.0
    %1004 = vmatprep.subr.mxu0 0.0
    %1005 = vmatpush1.msra.mxu0 0.0
    %1006 = vmatprep.subr.mxu0 0.0
    %1007 = vmatpush1.msra.mxu0 0.0
    %1008 = vmatprep.subr.mxu0 0.0
    %1009 = vmatpush1.msra.mxu0 0.0
    %1010 = vmatprep.subr.mxu0 0.0
    %1011 = vmatpush1.msra.mxu0 0.0
    %1012 = vmatprep.subr.mxu0 0.0
    %1013 = vmatpush1.msra.mxu0 0.0
    %1014 = vmatprep.subr.mxu0 0.0
    %1015 = vmatpush1.msra.mxu0 0.0
    %1016 = vmatprep.subr.mxu0 0.0
    %1017 = vmatpush1.msra.mxu0 0.0
    %1018 = vmatprep.subr.mxu0 0.0
    %1019 = vmatpush1.msra.mxu0 %v45
    %1020 = vmatprep.subr.mxu0 0.0
    %1021 = vmatpush1.msra.mxu0 %v44
    %1022 = vmatprep.subr.mxu0 0.0
    %1023 = vmatpush1.msra.mxu0 %v43
    %1024 = vmatprep.subr.mxu0 0.0
    %1025 = vmatpush1.msra.mxu0 %v42
    %1026 = vmatprep.subr.mxu0 0.0
    %1027 = vmatpush2.msra.mxu0 0.0
    %1028 = vmatprep.subr.mxu0 0.0
    %1029 = vmatpush2.msra.mxu0 0.0
    %1030 = vmatprep.subr.mxu0 0.0
    %1031 = vmatpush2.msra.mxu0 0.0
    %1032 = vmatprep.subr.mxu0 0.0
    %1033 = vmatpush2.msra.mxu0 0.0
    %1034 = vmatprep.subr.mxu0 0.0
    %1035 = vmatpush2.msra.mxu0 0.0
    %1036 = vmatprep.subr.mxu0 0.0
    %1037 = vmatpush2.msra.mxu0 0.0
    %1038 = vmatprep.subr.mxu0 0.0
    %1039 = vmatpush2.msra.mxu0 0.0
    %1040 = vmatprep.subr.mxu0 0.0
    %1041 = vmatpush2.msra.mxu0 0.0
    %1042 = vmatprep.subr.mxu0 0.0
    %1043 = vmatpush2.msra.mxu0 0.0
    %1044 = vmatprep.subr.mxu0 0.0
    %1045 = vmatpush2.msra.mxu0 0.0
    %1046 = vmatprep.subr.mxu0 0.0
    %1047 = vmatpush2.msra.mxu0 0.0
    %1048 = vmatprep.subr.mxu0 0.0
    %1049 = vmatpush2.msra.mxu0 0.0
    %1050 = vmatprep.subr.mxu0 0.0
    %1051 = vmatpush2.msra.mxu0 0.0
    %1052 = vmatprep.subr.mxu0 0.0
    %1053 = vmatpush2.msra.mxu0 0.0
    %1054 = vmatprep.subr.mxu0 0.0
    %1055 = vmatpush2.msra.mxu0 0.0
    %1056 = vmatprep.subr.mxu0 0.0
    %1057 = vmatpush2.msra.mxu0 0.0
    %1058 = vmatprep.mubr.f32.mxu0 0.0
    %1059 = vmatmul.mubr.f32.gmra.mxu0 %v992
    %v1060 = vpop.f32.mrf.mxu0
    %v1061 = vadd.f32 %v253, %v1060
    %v1062 = vpop.f32.mrf.mxu0
    %1063 = vdwg.mxu0
    %v1065 = vrot.slane %v1061, 2
    %v1067 = vadd.f32 %v247, %v1065
    %v1068 = vxor.u32 %v1067, 2147483648
    %v1069 = vmul.f32 %v1068, 1.442695
    %v1070 = vpow.pop %v1069
    %v1071 = vadd.f32 %v1070, 1.0
    %v1072 = vrcp.pop %v1071
    %v1073 = vmul.f32 1.0, %v1072
    %1074 = vrot.lane.b32.xlu0 %v1065, 64
    %v1075 = vpop.permute.xlu0 %1074
    %v1077 = vmul.f32 %v1073, %v1075
    %1079 = vrot.lane.b32.xlu0 %v1077, 64
    %v1080 = vpop.permute.xlu0 %1079
    %v1082 = vadd.f32 %v247, %v1080
    %v1083 = vtanh.pop %v1082
    %v1084 = vsub.f32 1.0, %v1073
    %1086 = vrot.lane.b32.xlu0 %v1083, 96
    %v1087 = vpop.permute.xlu0 %1086
    %v1089 = vmul.f32 %v1084, %v1087
    %v1090 = vrot.slane %v987, 6
    %v1092 = vmul.f32 %v1073, %v1090
    %v1093 = vadd.f32 %v1089, %v1092
    %1095 = vrot.lane.b32.xlu0 %v1093, 96
    %v1096 = vpop.permute.xlu0 %1095
    %vm1098 = vcmask 261126
    %1099 = vst.msk [vmem:[#allocation6 - $0x6] sm:$0xc0] %vm1098, %v1096
    %v1101 = vunpack.c.l.s4 1966171168
    %v1102 = vunpack.c.0.s8 %v1101
    %v1103 = vlaneseq
    %v1104 = vshrl.u32 %v1103, 7
    %v1105 = vsub.s32 %v1102, %v1104
    %v1106 = vrot.slane %v356, %v1105
    %v1107 = vcombine.high %v1106, %v1106
    %v1109 = vunpack.c.l.s4 1966171168
    %v1110 = vunpack.c.0.s8 %v1109
    %v1111 = vlaneseq
    %v1112 = vshrl.u32 %v1111, 7
    %v1113 = vsub.s32 %v1110, %v1112
    %v1114 = vrot.slane %v1106, %v1113
    %v1116 = vunpack.c.l.s4 1966171168
    %v1117 = vunpack.c.0.s8 %v1116
    %v1118 = vlaneseq
    %v1119 = vshrl.u32 %v1118, 7
    %v1120 = vsub.s32 %v1117, %v1119
    %v1121 = vrot.slane %v1107, %v1120
    %v1125 = vunpack.c.l.s4 1966171168
    %v1126 = vunpack.c.0.s8 %v1125
    %v1127 = vlaneseq
    %v1128 = vshrl.u32 %v1127, 7
    %v1129 = vsub.s32 %v1126, %v1128
    %v1130 = vrot.slane %v461, %v1129
    %v1131 = vcombine.high %v1130, %v1130
    %v1133 = vunpack.c.l.s4 1966171168
    %v1134 = vunpack.c.0.s8 %v1133
    %v1135 = vlaneseq
    %v1136 = vshrl.u32 %v1135, 7
    %v1137 = vsub.s32 %v1134, %v1136
    %v1138 = vrot.slane %v1130, %v1137
    %v1140 = vunpack.c.l.s4 1966171168
    %v1141 = vunpack.c.0.s8 %v1140
    %v1142 = vlaneseq
    %v1143 = vshrl.u32 %v1142, 7
    %v1144 = vsub.s32 %v1141, %v1143
    %v1145 = vrot.slane %v1131, %v1144
    %v1146 = vcombine.high %v1138, %v1138
    %v1147 = vcombine.high %v1145, %v1145
    %v1148 = vcombine.high %v567, %v567
    %v1150 = vunpack.c.l.s4 1966171168
    %v1151 = vunpack.c.0.s8 %v1150
    %v1152 = vlaneseq
    %v1153 = vshrl.u32 %v1152, 7
    %v1154 = vsub.s32 %v1151, %v1153
    %v1155 = vrot.slane %v1148, %v1154
    %v1156 = vcombine.high %v1155, %v1155
    %v1158 = vunpack.c.l.s4 1966171168
    %v1159 = vunpack.c.0.s8 %v1158
    %v1160 = vlaneseq
    %v1161 = vshrl.u32 %v1160, 7
    %v1162 = vsub.s32 %v1159, %v1161
    %v1163 = vrot.slane %v1155, %v1162
    %v1165 = vunpack.c.l.s4 1966171168
    %v1166 = vunpack.c.0.s8 %v1165
    %v1167 = vlaneseq
    %v1168 = vshrl.u32 %v1167, 7
    %v1169 = vsub.s32 %v1166, %v1168
    %v1170 = vrot.slane %v1156, %v1169
    %v1171 = vcombine.high %v673, %v673
    %v1173 = vunpack.c.l.s4 1966171168
    %v1174 = vunpack.c.0.s8 %v1173
    %v1175 = vlaneseq
    %v1176 = vshrl.u32 %v1175, 7
    %v1177 = vsub.s32 %v1174, %v1176
    %v1178 = vrot.slane %v1171, %v1177
    %v1179 = vcombine.high %v1178, %v1178
    %v1181 = vunpack.c.l.s4 1966171168
    %v1182 = vunpack.c.0.s8 %v1181
    %v1183 = vlaneseq
    %v1184 = vshrl.u32 %v1183, 7
    %v1185 = vsub.s32 %v1182, %v1184
    %v1186 = vrot.slane %v1178, %v1185
    %v1188 = vunpack.c.l.s4 1966171168
    %v1189 = vunpack.c.0.s8 %v1188
    %v1190 = vlaneseq
    %v1191 = vshrl.u32 %v1190, 7
    %v1192 = vsub.s32 %v1189, %v1191
    %v1193 = vrot.slane %v1179, %v1192
    %v1194 = vcombine.high %v1186, %v1186
    %v1195 = vcombine.high %v1193, %v1193
    %v1197 = vunpack.c.l.s4 1966171168
    %v1198 = vunpack.c.0.s8 %v1197
    %v1199 = vlaneseq
    %v1200 = vshrl.u32 %v1199, 7
    %v1201 = vsub.s32 %v1198, %v1200
    %v1202 = vrot.slane %v776, %v1201
    %v1203 = vcombine.high %v1202, %v1202
    %v1205 = vunpack.c.l.s4 1966171168
    %v1206 = vunpack.c.0.s8 %v1205
    %v1207 = vlaneseq
    %v1208 = vshrl.u32 %v1207, 7
    %v1209 = vsub.s32 %v1206, %v1208
    %v1210 = vrot.slane %v1202, %v1209
    %v1212 = vunpack.c.l.s4 1966171168
    %v1213 = vunpack.c.0.s8 %v1212
    %v1214 = vlaneseq
    %v1215 = vshrl.u32 %v1214, 7
    %v1216 = vsub.s32 %v1213, %v1215
    %v1217 = vrot.slane %v1203, %v1216
    %v1219 = vunpack.c.l.s4 1966171168
    %v1220 = vunpack.c.0.s8 %v1219
    %v1221 = vlaneseq
    %v1222 = vshrl.u32 %v1221, 7
    %v1223 = vsub.s32 %v1220, %v1222
    %v1224 = vrot.slane %v881, %v1223
    %v1225 = vcombine.high %v1224, %v1224
    %v1227 = vunpack.c.l.s4 1966171168
    %v1228 = vunpack.c.0.s8 %v1227
    %v1229 = vlaneseq
    %v1230 = vshrl.u32 %v1229, 7
    %v1231 = vsub.s32 %v1228, %v1230
    %v1232 = vrot.slane %v1224, %v1231
    %v1234 = vunpack.c.l.s4 1966171168
    %v1235 = vunpack.c.0.s8 %v1234
    %v1236 = vlaneseq
    %v1237 = vshrl.u32 %v1236, 7
    %v1238 = vsub.s32 %v1235, %v1237
    %v1239 = vrot.slane %v1225, %v1238
    %v1240 = vcombine.high %v1232, %v1232
    %v1241 = vcombine.high %v1239, %v1239
    %v1242 = vcombine.high %v987, %v987
    %v1244 = vunpack.c.l.s4 1966171168
    %v1245 = vunpack.c.0.s8 %v1244
    %v1246 = vlaneseq
    %v1247 = vshrl.u32 %v1246, 7
    %v1248 = vsub.s32 %v1245, %v1247
    %v1249 = vrot.slane %v1242, %v1248
    %v1250 = vcombine.high %v1249, %v1249
    %v1252 = vunpack.c.l.s4 1966171168
    %v1253 = vunpack.c.0.s8 %v1252
    %v1254 = vlaneseq
    %v1255 = vshrl.u32 %v1254, 7
    %v1256 = vsub.s32 %v1253, %v1255
    %v1257 = vrot.slane %v1249, %v1256
    %v1259 = vunpack.c.l.s4 1966171168
    %v1260 = vunpack.c.0.s8 %v1259
    %v1261 = vlaneseq
    %v1262 = vshrl.u32 %v1261, 7
    %v1263 = vsub.s32 %v1260, %v1262
    %v1264 = vrot.slane %v1250, %v1263
    %v1265 = vcombine.high %v1093, %v1093
    %v1267 = vunpack.c.l.s4 1966171168
    %v1268 = vunpack.c.0.s8 %v1267
    %v1269 = vlaneseq
    %v1270 = vshrl.u32 %v1269, 7
    %v1271 = vsub.s32 %v1268, %v1270
    %v1272 = vrot.slane %v1265, %v1271
    %v1273 = vcombine.high %v1272, %v1272
    %v1275 = vunpack.c.l.s4 1966171168
    %v1276 = vunpack.c.0.s8 %v1275
    %v1277 = vlaneseq
    %v1278 = vshrl.u32 %v1277, 7
    %v1279 = vsub.s32 %v1276, %v1278
    %v1280 = vrot.slane %v1272, %v1279
    %v1282 = vunpack.c.l.s4 1966171168
    %v1283 = vunpack.c.0.s8 %v1282
    %v1284 = vlaneseq
    %v1285 = vshrl.u32 %v1284, 7
    %v1286 = vsub.s32 %v1283, %v1285
    %v1287 = vrot.slane %v1273, %v1286
    %v1288 = vcombine.high %v1280, %v1280
    %v1289 = vcombine.high %v1287, %v1287
    %v1290 = vlaneseq
    %v1291 = vshrl.u32 %v1290, 7
    %v1292 = vsub.s32 0, %v1291
    %v1293 = vrot.slane %v1146, %v1292
    %v1294 = vlaneseq
    %v1295 = vshrl.u32 %v1294, 7
    %v1296 = vsub.s32 0, %v1295
    %v1297 = vrot.slane %v1147, %v1296
    %v1300 = vlaneseq
    %v1301 = vshrl.u32 %v1300, 7
    %v1302 = vsub.s32 0, %v1301
    %v1303 = vrot.slane %v1163, %v1302
    %v1304 = vlaneseq
    %v1305 = vshrl.u32 %v1304, 7
    %v1306 = vsub.s32 0, %v1305
    %v1307 = vrot.slane %v1170, %v1306
    %v1310 = vlaneseq
    %v1311 = vshrl.u32 %v1310, 7
    %v1312 = vsub.s32 0, %v1311
    %v1313 = vrot.slane %v1194, %v1312
    %v1314 = vlaneseq
    %v1315 = vshrl.u32 %v1314, 7
    %v1316 = vsub.s32 0, %v1315
    %v1317 = vrot.slane %v1195, %v1316
    %v1320 = vlaneseq
    %v1321 = vshrl.u32 %v1320, 7
    %v1322 = vsub.s32 0, %v1321
    %v1323 = vrot.slane %v1210, %v1322
    %v1324 = vlaneseq
    %v1325 = vshrl.u32 %v1324, 7
    %v1326 = vsub.s32 0, %v1325
    %v1327 = vrot.slane %v1217, %v1326
    %v1330 = vlaneseq
    %v1331 = vshrl.u32 %v1330, 7
    %v1332 = vsub.s32 0, %v1331
    %v1333 = vrot.slane %v1240, %v1332
    %v1334 = vlaneseq
    %v1335 = vshrl.u32 %v1334, 7
    %v1336 = vsub.s32 0, %v1335
    %v1337 = vrot.slane %v1241, %v1336
    %v1340 = vlaneseq
    %v1341 = vshrl.u32 %v1340, 7
    %v1342 = vsub.s32 0, %v1341
    %v1343 = vrot.slane %v1257, %v1342
    %v1344 = vlaneseq
    %v1345 = vshrl.u32 %v1344, 7
    %v1346 = vsub.s32 0, %v1345
    %v1347 = vrot.slane %v1264, %v1346
    %v1350 = vlaneseq
    %v1351 = vshrl.u32 %v1350, 7
    %v1352 = vsub.s32 0, %v1351
    %v1353 = vrot.slane %v1288, %v1352
    %v1354 = vlaneseq
    %v1355 = vshrl.u32 %v1354, 7
    %v1356 = vsub.s32 0, %v1355
    %v1357 = vrot.slane %v1289, %v1356
    %vm1360 = vcmask 1040384
    %v1361 = vsel %vm1360, %v1114, %v1293
    %v1362 = vsel %vm1360, %v1121, %v1297
    %vm1363 = vcmask 1041408
    %v1364 = vsel %vm1363, %v1361, %v1303
    %v1365 = vsel %vm1363, %v1362, %v1307
    %vm1366 = vcmask 1042432
    %v1367 = vsel %vm1366, %v1364, %v1313
    %v1368 = vsel %vm1366, %v1365, %v1317
    %vm1369 = vcmask 1043456
    %v1370 = vsel %vm1369, %v1367, %v1323
    %v1371 = vsel %vm1369, %v1368, %v1327
    %vm1372 = vcmask 1044480
    %v1373 = vsel %vm1372, %v1370, %v1333
    %v1374 = vsel %vm1372, %v1371, %v1337
    %vm1375 = vcmask 1045504
    %v1376 = vsel %vm1375, %v1373, %v1343
    %v1377 = vsel %vm1375, %v1374, %v1347
    %vm1378 = vcmask 1046528
    %v1379 = vsel %vm1378, %v1376, %v1353
    %v1380 = vsel %vm1378, %v1377, %v1357
    %v1381 = vld [vmem:[%s2] sm:$0xff]
    %v1382 = vld [vmem:[%s2 + $0x8] sm:$0xff]
    %1384 = vrot.lane.b32.xlu0 %v1379, 96
    %v1385 = vpop.permute.xlu0 %1384
    %v1386 = vsel %vm254, %v1385, 0
    %v1389 = vsel %vm254, %v1381, 0
    %1391 = vmatprep.subr.mxu0 0.0
    %1392 = vmatpush1.xpose.msra.mxu0 0.0
    %1393 = vmatprep.subr.mxu0 0.0
    %1394 = vmatpush1.xpose.msra.mxu0 0.0
    %1395 = vmatprep.subr.mxu0 0.0
    %1396 = vmatpush1.xpose.msra.mxu0 0.0
    %1397 = vmatprep.subr.mxu0 0.0
    %1398 = vmatpush1.xpose.msra.mxu0 0.0
    %1399 = vmatprep.subr.mxu0 0.0
    %1400 = vmatpush1.xpose.msra.mxu0 0.0
    %1401 = vmatprep.subr.mxu0 0.0
    %1402 = vmatpush1.xpose.msra.mxu0 0.0
    %1403 = vmatprep.subr.mxu0 0.0
    %1404 = vmatpush1.xpose.msra.mxu0 0.0
    %1405 = vmatprep.subr.mxu0 0.0
    %1406 = vmatpush1.xpose.msra.mxu0 0.0
    %1407 = vmatprep.subr.mxu0 0.0
    %1408 = vmatpush1.xpose.msra.mxu0 0.0
    %1409 = vmatprep.subr.mxu0 0.0
    %1410 = vmatpush1.xpose.msra.mxu0 0.0
    %1411 = vmatprep.subr.mxu0 0.0
    %1412 = vmatpush1.xpose.msra.mxu0 0.0
    %1413 = vmatprep.subr.mxu0 0.0
    %1414 = vmatpush1.xpose.msra.mxu0 0.0
    %1415 = vmatprep.subr.mxu0 0.0
    %1416 = vmatpush1.xpose.msra.mxu0 0.0
    %1417 = vmatprep.subr.mxu0 0.0
    %1418 = vmatpush1.xpose.msra.mxu0 0.0
    %1419 = vmatprep.subr.mxu0 0.0
    %1420 = vmatpush1.xpose.msra.mxu0 0.0
    %1421 = vmatprep.subr.mxu0 0.0
    %1422 = vmatpush1.xpose.msra.mxu0 %v1389
    %1423 = vmatprep.subr.mxu0 0.0
    %1424 = vmatpush2.xpose.msra.mxu0 0.0
    %1425 = vmatprep.subr.mxu0 0.0
    %1426 = vmatpush2.xpose.msra.mxu0 0.0
    %1427 = vmatprep.subr.mxu0 0.0
    %1428 = vmatpush2.xpose.msra.mxu0 0.0
    %1429 = vmatprep.subr.mxu0 0.0
    %1430 = vmatpush2.xpose.msra.mxu0 0.0
    %1431 = vmatprep.subr.mxu0 0.0
    %1432 = vmatpush2.xpose.msra.mxu0 0.0
    %1433 = vmatprep.subr.mxu0 0.0
    %1434 = vmatpush2.xpose.msra.mxu0 0.0
    %1435 = vmatprep.subr.mxu0 0.0
    %1436 = vmatpush2.xpose.msra.mxu0 0.0
    %1437 = vmatprep.subr.mxu0 0.0
    %1438 = vmatpush2.xpose.msra.mxu0 0.0
    %1439 = vmatprep.subr.mxu0 0.0
    %1440 = vmatpush2.xpose.msra.mxu0 0.0
    %1441 = vmatprep.subr.mxu0 0.0
    %1442 = vmatpush2.xpose.msra.mxu0 0.0
    %1443 = vmatprep.subr.mxu0 0.0
    %1444 = vmatpush2.xpose.msra.mxu0 0.0
    %1445 = vmatprep.subr.mxu0 0.0
    %1446 = vmatpush2.xpose.msra.mxu0 0.0
    %1447 = vmatprep.subr.mxu0 0.0
    %1448 = vmatpush2.xpose.msra.mxu0 0.0
    %1449 = vmatprep.subr.mxu0 0.0
    %1450 = vmatpush2.xpose.msra.mxu0 0.0
    %1451 = vmatprep.subr.mxu0 0.0
    %1452 = vmatpush2.xpose.msra.mxu0 0.0
    %1453 = vmatprep.subr.mxu0 0.0
    %1454 = vmatpush2.xpose.msra.mxu0 0.0
    %1455 = vmatprep.mubr.f32.mxu0 0.0
    %1456 = vmatmul.mubr.f32.gmra.mxu0 %v1386
    %v1457 = vpop.f32.mrf.mxu0
    %v1458 = vadd.f32 0.0, %v1457
    %v1459 = vpop.f32.mrf.mxu0
    %1460 = vdwg.mxu0
    %1462 = vrot.lane.b32.xlu0 %v1380, 96
    %v1463 = vpop.permute.xlu0 %1462
    %v1464 = vsel %vm254, %v1463, 0
    %v1467 = vsel %vm254, %v1382, 0
    %1469 = vmatprep.subr.mxu0 0.0
    %1470 = vmatpush1.xpose.msra.mxu0 0.0
    %1471 = vmatprep.subr.mxu0 0.0
    %1472 = vmatpush1.xpose.msra.mxu0 0.0
    %1473 = vmatprep.subr.mxu0 0.0
    %1474 = vmatpush1.xpose.msra.mxu0 0.0
    %1475 = vmatprep.subr.mxu0 0.0
    %1476 = vmatpush1.xpose.msra.mxu0 0.0
    %1477 = vmatprep.subr.mxu0 0.0
    %1478 = vmatpush1.xpose.msra.mxu0 0.0
    %1479 = vmatprep.subr.mxu0 0.0
    %1480 = vmatpush1.xpose.msra.mxu0 0.0
    %1481 = vmatprep.subr.mxu0 0.0
    %1482 = vmatpush1.xpose.msra.mxu0 0.0
    %1483 = vmatprep.subr.mxu0 0.0
    %1484 = vmatpush1.xpose.msra.mxu0 0.0
    %1485 = vmatprep.subr.mxu0 0.0
    %1486 = vmatpush1.xpose.msra.mxu0 0.0
    %1487 = vmatprep.subr.mxu0 0.0
    %1488 = vmatpush1.xpose.msra.mxu0 0.0
    %1489 = vmatprep.subr.mxu0 0.0
    %1490 = vmatpush1.xpose.msra.mxu0 0.0
    %1491 = vmatprep.subr.mxu0 0.0
    %1492 = vmatpush1.xpose.msra.mxu0 0.0
    %1493 = vmatprep.subr.mxu0 0.0
    %1494 = vmatpush1.xpose.msra.mxu0 0.0
    %1495 = vmatprep.subr.mxu0 0.0
    %1496 = vmatpush1.xpose.msra.mxu0 0.0
    %1497 = vmatprep.subr.mxu0 0.0
    %1498 = vmatpush1.xpose.msra.mxu0 0.0
    %1499 = vmatprep.subr.mxu0 0.0
    %1500 = vmatpush1.xpose.msra.mxu0 %v1467
    %1501 = vmatprep.subr.mxu0 0.0
    %1502 = vmatpush2.xpose.msra.mxu0 0.0
    %1503 = vmatprep.subr.mxu0 0.0
    %1504 = vmatpush2.xpose.msra.mxu0 0.0
    %1505 = vmatprep.subr.mxu0 0.0
    %1506 = vmatpush2.xpose.msra.mxu0 0.0
    %1507 = vmatprep.subr.mxu0 0.0
    %1508 = vmatpush2.xpose.msra.mxu0 0.0
    %1509 = vmatprep.subr.mxu0 0.0
    %1510 = vmatpush2.xpose.msra.mxu0 0.0
    %1511 = vmatprep.subr.mxu0 0.0
    %1512 = vmatpush2.xpose.msra.mxu0 0.0
    %1513 = vmatprep.subr.mxu0 0.0
    %1514 = vmatpush2.xpose.msra.mxu0 0.0
    %1515 = vmatprep.subr.mxu0 0.0
    %1516 = vmatpush2.xpose.msra.mxu0 0.0
    %1517 = vmatprep.subr.mxu0 0.0
    %1518 = vmatpush2.xpose.msra.mxu0 0.0
    %1519 = vmatprep.subr.mxu0 0.0
    %1520 = vmatpush2.xpose.msra.mxu0 0.0
    %1521 = vmatprep.subr.mxu0 0.0
    %1522 = vmatpush2.xpose.msra.mxu0 0.0
    %1523 = vmatprep.subr.mxu0 0.0
    %1524 = vmatpush2.xpose.msra.mxu0 0.0
    %1525 = vmatprep.subr.mxu0 0.0
    %1526 = vmatpush2.xpose.msra.mxu0 0.0
    %1527 = vmatprep.subr.mxu0 0.0
    %1528 = vmatpush2.xpose.msra.mxu0 0.0
    %1529 = vmatprep.subr.mxu0 0.0
    %1530 = vmatpush2.xpose.msra.mxu0 0.0
    %1531 = vmatprep.subr.mxu0 0.0
    %1532 = vmatpush2.xpose.msra.mxu0 0.0
    %1533 = vmatprep.mubr.f32.mxu0 0.0
    %1534 = vmatmul.mubr.f32.gmra.mxu0 %v1464
    %v1535 = vpop.f32.mrf.mxu0
    %v1536 = vadd.f32 0.0, %v1535
    %v1537 = vpop.f32.mrf.mxu0
    %1538 = vdwg.mxu0
    %vm1539 = vcmask 64512
    %v1540 = vsel %vm1539, %v1458, -inf
    %1541 = vmax.xlane.f32.xlu0 %v1540
    %v1542 = vpop.xlane.xlu0 %1541
    %v1543 = vsel %vm1539, %v1536, -inf
    %1544 = vmax.xlane.f32.xlu0 %v1543
    %v1545 = vpop.xlane.xlu0 %1544
    %v1546 = vsub.f32 %v1458, %v1542
    %v1547 = vsub.f32 %v1536, %v1545
    %v1548 = vmul.f32 %v1546, 1.442695
    %v1549 = vpow.pop %v1548
    %v1550 = vmul.f32 %v1547, 1.442695
    %v1551 = vpow.pop %v1550
    %v1552 = vsel %vm1539, %v1549, 0.0
    %1553 = vadd.xlane.f32.xlu0 %v1552
    %v1554 = vpop.xlane.xlu0 %1553
    %v1555 = vsel %vm1539, %v1551, 0.0
    %1556 = vadd.xlane.f32.xlu0 %v1555
    %v1557 = vpop.xlane.xlu0 %1556
    %v1558 = vrcp.pop %v1554
    %v1559 = vmul.f32 %v1549, %v1558
    %v1560 = vrcp.pop %v1557
    %v1561 = vmul.f32 %v1551, %v1560
    %v1563 = vsel %vm1539, %v1559, 0
    %1565 = vmatprep.subr.mxu0 0.0
    %1566 = vmatpush1.msra.mxu0 0.0
    %1567 = vmatprep.subr.mxu0 0.0
    %1568 = vmatpush1.msra.mxu0 0.0
    %1569 = vmatprep.subr.mxu0 0.0
    %1570 = vmatpush1.msra.mxu0 0.0
    %1571 = vmatprep.subr.mxu0 0.0
    %1572 = vmatpush1.msra.mxu0 0.0
    %1573 = vmatprep.subr.mxu0 0.0
    %1574 = vmatpush1.msra.mxu0 0.0
    %1575 = vmatprep.subr.mxu0 0.0
    %1576 = vmatpush1.msra.mxu0 0.0
    %1577 = vmatprep.subr.mxu0 0.0
    %1578 = vmatpush1.msra.mxu0 0.0
    %1579 = vmatprep.subr.mxu0 0.0
    %1580 = vmatpush1.msra.mxu0 0.0
    %1581 = vmatprep.subr.mxu0 0.0
    %1582 = vmatpush1.msra.mxu0 0.0
    %1583 = vmatprep.subr.mxu0 0.0
    %1584 = vmatpush1.msra.mxu0 0.0
    %1585 = vmatprep.subr.mxu0 0.0
    %1586 = vmatpush1.msra.mxu0 0.0
    %1587 = vmatprep.subr.mxu0 0.0
    %1588 = vmatpush1.msra.mxu0 0.0
    %1589 = vmatprep.subr.mxu0 0.0
    %1590 = vmatpush1.msra.mxu0 0.0
    %1591 = vmatprep.subr.mxu0 0.0
    %1592 = vmatpush1.msra.mxu0 0.0
    %1593 = vmatprep.subr.mxu0 0.0
    %1594 = vmatpush1.msra.mxu0 0.0
    %1595 = vmatprep.subr.mxu0 0.0
    %1596 = vmatpush1.msra.mxu0 %v1381
    %1597 = vmatprep.subr.mxu0 0.0
    %1598 = vmatpush2.msra.mxu0 0.0
    %1599 = vmatprep.subr.mxu0 0.0
    %1600 = vmatpush2.msra.mxu0 0.0
    %1601 = vmatprep.subr.mxu0 0.0
    %1602 = vmatpush2.msra.mxu0 0.0
    %1603 = vmatprep.subr.mxu0 0.0
    %1604 = vmatpush2.msra.mxu0 0.0
    %1605 = vmatprep.subr.mxu0 0.0
    %1606 = vmatpush2.msra.mxu0 0.0
    %1607 = vmatprep.subr.mxu0 0.0
    %1608 = vmatpush2.msra.mxu0 0.0
    %1609 = vmatprep.subr.mxu0 0.0
    %1610 = vmatpush2.msra.mxu0 0.0
    %1611 = vmatprep.subr.mxu0 0.0
    %1612 = vmatpush2.msra.mxu0 0.0
    %1613 = vmatprep.subr.mxu0 0.0
    %1614 = vmatpush2.msra.mxu0 0.0
    %1615 = vmatprep.subr.mxu0 0.0
    %1616 = vmatpush2.msra.mxu0 0.0
    %1617 = vmatprep.subr.mxu0 0.0
    %1618 = vmatpush2.msra.mxu0 0.0
    %1619 = vmatprep.subr.mxu0 0.0
    %1620 = vmatpush2.msra.mxu0 0.0
    %1621 = vmatprep.subr.mxu0 0.0
    %1622 = vmatpush2.msra.mxu0 0.0
    %1623 = vmatprep.subr.mxu0 0.0
    %1624 = vmatpush2.msra.mxu0 0.0
    %1625 = vmatprep.subr.mxu0 0.0
    %1626 = vmatpush2.msra.mxu0 0.0
    %1627 = vmatprep.subr.mxu0 0.0
    %1628 = vmatpush2.msra.mxu0 0.0
    %1629 = vmatprep.mubr.f32.mxu0 0.0
    %1630 = vmatmul.mubr.f32.gmra.mxu0 %v1563
    %v1631 = vpop.f32.mrf.mxu0
    %v1632 = vadd.f32 0.0, %v1631
    %v1633 = vpop.f32.mrf.mxu0
    %1634 = vdwg.mxu0
    %v1636 = vsel %vm1539, %v1561, 0
    %1638 = vmatprep.subr.mxu0 0.0
    %1639 = vmatpush1.msra.mxu0 0.0
    %1640 = vmatprep.subr.mxu0 0.0
    %1641 = vmatpush1.msra.mxu0 0.0
    %1642 = vmatprep.subr.mxu0 0.0
    %1643 = vmatpush1.msra.mxu0 0.0
    %1644 = vmatprep.subr.mxu0 0.0
    %1645 = vmatpush1.msra.mxu0 0.0
    %1646 = vmatprep.subr.mxu0 0.0
    %1647 = vmatpush1.msra.mxu0 0.0
    %1648 = vmatprep.subr.mxu0 0.0
    %1649 = vmatpush1.msra.mxu0 0.0
    %1650 = vmatprep.subr.mxu0 0.0
    %1651 = vmatpush1.msra.mxu0 0.0
    %1652 = vmatprep.subr.mxu0 0.0
    %1653 = vmatpush1.msra.mxu0 0.0
    %1654 = vmatprep.subr.mxu0 0.0
    %1655 = vmatpush1.msra.mxu0 0.0
    %1656 = vmatprep.subr.mxu0 0.0
    %1657 = vmatpush1.msra.mxu0 0.0
    %1658 = vmatprep.subr.mxu0 0.0
    %1659 = vmatpush1.msra.mxu0 0.0
    %1660 = vmatprep.subr.mxu0 0.0
    %1661 = vmatpush1.msra.mxu0 0.0
    %1662 = vmatprep.subr.mxu0 0.0
    %1663 = vmatpush1.msra.mxu0 0.0
    %1664 = vmatprep.subr.mxu0 0.0
    %1665 = vmatpush1.msra.mxu0 0.0
    %1666 = vmatprep.subr.mxu0 0.0
    %1667 = vmatpush1.msra.mxu0 0.0
    %1668 = vmatprep.subr.mxu0 0.0
    %1669 = vmatpush1.msra.mxu0 %v1382
    %1670 = vmatprep.subr.mxu0 0.0
    %1671 = vmatpush2.msra.mxu0 0.0
    %1672 = vmatprep.subr.mxu0 0.0
    %1673 = vmatpush2.msra.mxu0 0.0
    %1674 = vmatprep.subr.mxu0 0.0
    %1675 = vmatpush2.msra.mxu0 0.0
    %1676 = vmatprep.subr.mxu0 0.0
    %1677 = vmatpush2.msra.mxu0 0.0
    %1678 = vmatprep.subr.mxu0 0.0
    %1679 = vmatpush2.msra.mxu0 0.0
    %1680 = vmatprep.subr.mxu0 0.0
    %1681 = vmatpush2.msra.mxu0 0.0
    %1682 = vmatprep.subr.mxu0 0.0
    %1683 = vmatpush2.msra.mxu0 0.0
    %1684 = vmatprep.subr.mxu0 0.0
    %1685 = vmatpush2.msra.mxu0 0.0
    %1686 = vmatprep.subr.mxu0 0.0
    %1687 = vmatpush2.msra.mxu0 0.0
    %1688 = vmatprep.subr.mxu0 0.0
    %1689 = vmatpush2.msra.mxu0 0.0
    %1690 = vmatprep.subr.mxu0 0.0
    %1691 = vmatpush2.msra.mxu0 0.0
    %1692 = vmatprep.subr.mxu0 0.0
    %1693 = vmatpush2.msra.mxu0 0.0
    %1694 = vmatprep.subr.mxu0 0.0
    %1695 = vmatpush2.msra.mxu0 0.0
    %1696 = vmatprep.subr.mxu0 0.0
    %1697 = vmatpush2.msra.mxu0 0.0
    %1698 = vmatprep.subr.mxu0 0.0
    %1699 = vmatpush2.msra.mxu0 0.0
    %1700 = vmatprep.subr.mxu0 0.0
    %1701 = vmatpush2.msra.mxu0 0.0
    %1702 = vmatprep.mubr.f32.mxu0 0.0
    %1703 = vmatmul.mubr.f32.gmra.mxu0 %v1636
    %v1704 = vpop.f32.mrf.mxu0
    %v1705 = vadd.f32 0.0, %v1704
    %v1706 = vpop.f32.mrf.mxu0
    %1707 = vdwg.mxu0
    %v1708 = vsel %vm254, %v1632, %v1379
    %v1709 = vsel %vm254, %v1705, %v1380
    %v1710 = vlaneseq
    %v1711 = vshrl.u32 %v1710, 7
    %v1712 = vsub.s32 0, %v1711
    %v1713 = vrot.slane %v60, %v1712
    %v1715 = vsel %vm168, %v1708, 0
    %v1718 = vsel %vm168, %v1709, 0
    %1720 = vmatprep.subr.mxu0 0.0
    %1721 = vmatpush1.msra.mxu0 0.0
    %1722 = vmatprep.subr.mxu0 0.0
    %1723 = vmatpush1.msra.mxu0 0.0
    %1724 = vmatprep.subr.mxu0 0.0
    %1725 = vmatpush1.msra.mxu0 0.0
    %1726 = vmatprep.subr.mxu0 0.0
    %1727 = vmatpush1.msra.mxu0 0.0
    %1728 = vmatprep.subr.mxu0 0.0
    %1729 = vmatpush1.msra.mxu0 0.0
    %1730 = vmatprep.subr.mxu0 0.0
    %1731 = vmatpush1.msra.mxu0 0.0
    %1732 = vmatprep.subr.mxu0 0.0
    %1733 = vmatpush1.msra.mxu0 0.0
    %1734 = vmatprep.subr.mxu0 0.0
    %1735 = vmatpush1.msra.mxu0 0.0
    %1736 = vmatprep.subr.mxu0 0.0
    %1737 = vmatpush1.msra.mxu0 %v55
    %1738 = vmatprep.subr.mxu0 0.0
    %1739 = vmatpush1.msra.mxu0 %v54
    %1740 = vmatprep.subr.mxu0 0.0
    %1741 = vmatpush1.msra.mxu0 %v53
    %1742 = vmatprep.subr.mxu0 0.0
    %1743 = vmatpush1.msra.mxu0 %v52
    %1744 = vmatprep.subr.mxu0 0.0
    %1745 = vmatpush1.msra.mxu0 %v51
    %1746 = vmatprep.subr.mxu0 0.0
    %1747 = vmatpush1.msra.mxu0 %v50
    %1748 = vmatprep.subr.mxu0 0.0
    %1749 = vmatpush1.msra.mxu0 %v49
    %1750 = vmatprep.subr.mxu0 0.0
    %1751 = vmatpush1.msra.mxu0 %v48
    %1752 = vmatprep.subr.mxu0 0.0
    %1753 = vmatpush2.msra.mxu0 0.0
    %1754 = vmatprep.subr.mxu0 0.0
    %1755 = vmatpush2.msra.mxu0 0.0
    %1756 = vmatprep.subr.mxu0 0.0
    %1757 = vmatpush2.msra.mxu0 0.0
    %1758 = vmatprep.subr.mxu0 0.0
    %1759 = vmatpush2.msra.mxu0 0.0
    %1760 = vmatprep.subr.mxu0 0.0
    %1761 = vmatpush2.msra.mxu0 0.0
    %1762 = vmatprep.subr.mxu0 0.0
    %1763 = vmatpush2.msra.mxu0 0.0
    %1764 = vmatprep.subr.mxu0 0.0
    %1765 = vmatpush2.msra.mxu0 0.0
    %1766 = vmatprep.subr.mxu0 0.0
    %1767 = vmatpush2.msra.mxu0 0.0
    %1768 = vmatprep.subr.mxu0 0.0
    %1769 = vmatpush2.msra.mxu0 0.0
    %1770 = vmatprep.subr.mxu0 0.0
    %1771 = vmatpush2.msra.mxu0 0.0
    %1772 = vmatprep.subr.mxu0 0.0
    %1773 = vmatpush2.msra.mxu0 0.0
    %1774 = vmatprep.subr.mxu0 0.0
    %1775 = vmatpush2.msra.mxu0 0.0
    %1776 = vmatprep.subr.mxu0 0.0
    %1777 = vmatpush2.msra.mxu0 0.0
    %1778 = vmatprep.subr.mxu0 0.0
    %1779 = vmatpush2.msra.mxu0 0.0
    %1780 = vmatprep.subr.mxu0 0.0
    %1781 = vmatpush2.msra.mxu0 0.0
    %1782 = vmatprep.subr.mxu0 0.0
    %1783 = vmatpush2.msra.mxu0 0.0
    %1784 = vmatprep.mubr.f32.mxu0 0.0
    %1785 = vmatmul.mubr.f32.gmra.mxu0 %v1715
    %v1786 = vpop.f32.mrf.mxu0
    %v1787 = vadd.f32 %v1713, %v1786
    %v1788 = vpop.f32.mrf.mxu0
    %1789 = vmatprep.mubr.f32.mxu0 0.0
    %1790 = vmatmul.mubr.f32.gmra.mxu0 %v1718
    %v1791 = vpop.f32.mrf.mxu0
    %v1792 = vadd.f32 %v1713, %v1791
    %v1793 = vpop.f32.mrf.mxu0
    %1794 = vdwg.mxu0
    %v1795 = vtanh.pop %v1787
    %v1796 = vtanh.pop %v1792
    %v1797 = vlaneseq
    %v1798 = vshrl.u32 %v1797, 7
    %v1799 = vsub.s32 0, %v1798
    %v1800 = vrot.slane %v65, %v1799
    %v1802 = vsel %vm254, %v1795, 0
    %v1805 = vsel %vm254, %v1796, 0
    %1807 = vmatprep.subr.mxu0 0.0
    %1808 = vmatpush1.msra.mxu0 0.0
    %1809 = vmatprep.subr.mxu0 0.0
    %1810 = vmatpush1.msra.mxu0 0.0
    %1811 = vmatprep.subr.mxu0 0.0
    %1812 = vmatpush1.msra.mxu0 0.0
    %1813 = vmatprep.subr.mxu0 0.0
    %1814 = vmatpush1.msra.mxu0 0.0
    %1815 = vmatprep.subr.mxu0 0.0
    %1816 = vmatpush1.msra.mxu0 0.0
    %1817 = vmatprep.subr.mxu0 0.0
    %1818 = vmatpush1.msra.mxu0 0.0
    %1819 = vmatprep.subr.mxu0 0.0
    %1820 = vmatpush1.msra.mxu0 0.0
    %1821 = vmatprep.subr.mxu0 0.0
    %1822 = vmatpush1.msra.mxu0 0.0
    %1823 = vmatprep.subr.mxu0 0.0
    %1824 = vmatpush1.msra.mxu0 0.0
    %1825 = vmatprep.subr.mxu0 0.0
    %1826 = vmatpush1.msra.mxu0 0.0
    %1827 = vmatprep.subr.mxu0 0.0
    %1828 = vmatpush1.msra.mxu0 0.0
    %1829 = vmatprep.subr.mxu0 0.0
    %1830 = vmatpush1.msra.mxu0 0.0
    %1831 = vmatprep.subr.mxu0 0.0
    %1832 = vmatpush1.msra.mxu0 %v64
    %1833 = vmatprep.subr.mxu0 0.0
    %1834 = vmatpush1.msra.mxu0 %v63
    %1835 = vmatprep.subr.mxu0 0.0
    %1836 = vmatpush1.msra.mxu0 %v62
    %1837 = vmatprep.subr.mxu0 0.0
    %1838 = vmatpush1.msra.mxu0 %v61
    %1839 = vmatprep.subr.mxu0 0.0
    %1840 = vmatpush2.msra.mxu0 0.0
    %1841 = vmatprep.subr.mxu0 0.0
    %1842 = vmatpush2.msra.mxu0 0.0
    %1843 = vmatprep.subr.mxu0 0.0
    %1844 = vmatpush2.msra.mxu0 0.0
    %1845 = vmatprep.subr.mxu0 0.0
    %1846 = vmatpush2.msra.mxu0 0.0
    %1847 = vmatprep.subr.mxu0 0.0
    %1848 = vmatpush2.msra.mxu0 0.0
    %1849 = vmatprep.subr.mxu0 0.0
    %1850 = vmatpush2.msra.mxu0 0.0
    %1851 = vmatprep.subr.mxu0 0.0
    %1852 = vmatpush2.msra.mxu0 0.0
    %1853 = vmatprep.subr.mxu0 0.0
    %1854 = vmatpush2.msra.mxu0 0.0
    %1855 = vmatprep.subr.mxu0 0.0
    %1856 = vmatpush2.msra.mxu0 0.0
    %1857 = vmatprep.subr.mxu0 0.0
    %1858 = vmatpush2.msra.mxu0 0.0
    %1859 = vmatprep.subr.mxu0 0.0
    %1860 = vmatpush2.msra.mxu0 0.0
    %1861 = vmatprep.subr.mxu0 0.0
    %1862 = vmatpush2.msra.mxu0 0.0
    %1863 = vmatprep.subr.mxu0 0.0
    %1864 = vmatpush2.msra.mxu0 0.0
    %1865 = vmatprep.subr.mxu0 0.0
    %1866 = vmatpush2.msra.mxu0 0.0
    %1867 = vmatprep.subr.mxu0 0.0
    %1868 = vmatpush2.msra.mxu0 0.0
    %1869 = vmatprep.subr.mxu0 0.0
    %1870 = vmatpush2.msra.mxu0 0.0
    %1871 = vmatprep.mubr.f32.mxu0 0.0
    %1872 = vmatmul.mubr.f32.gmra.mxu0 %v1802
    %v1873 = vpop.f32.mrf.mxu0
    %v1874 = vadd.f32 %v1800, %v1873
    %v1875 = vpop.f32.mrf.mxu0
    %1876 = vmatprep.mubr.f32.mxu0 0.0
    %1877 = vmatmul.mubr.f32.gmra.mxu0 %v1805
    %v1878 = vpop.f32.mrf.mxu0
    %v1879 = vadd.f32 %v1800, %v1878
    %v1880 = vpop.f32.mrf.mxu0
    %1881 = vdwg.mxu0
    %v1882 = vsel %vm168, %v1874, -inf
    %1883 = vmax.xlane.f32.xlu0 %v1882
    %v1884 = vpop.xlane.xlu0 %1883
    %v1885 = vsel %vm168, %v1879, -inf
    %1886 = vmax.xlane.f32.xlu0 %v1885
    %v1887 = vpop.xlane.xlu0 %1886
    %v1888 = vsub.f32 %v1874, %v1884
    %v1889 = vsub.f32 %v1879, %v1887
    %v1890 = vmul.f32 %v1888, 1.442695
    %v1891 = vpow.pop %v1890
    %v1892 = vmul.f32 %v1889, 1.442695
    %v1893 = vpow.pop %v1892
    %v1894 = vsel %vm168, %v1891, 0.0
    %1895 = vadd.xlane.f32.xlu0 %v1894
    %v1896 = vpop.xlane.xlu0 %1895
    %v1897 = vsel %vm168, %v1893, 0.0
    %1898 = vadd.xlane.f32.xlu0 %v1897
    %v1899 = vpop.xlane.xlu0 %1898
    %v1900 = vrcp.pop %v1896
    %v1901 = vmul.f32 %v1891, %v1900
    %v1902 = vrcp.pop %v1899
    %v1903 = vmul.f32 %v1893, %v1902
    %v1904 = vxor.u32 %v1874, 2147483648
    %v1905 = vxor.u32 %v1879, 2147483648
    %v1906 = vmul.f32 %v1904, 1.442695
    %v1907 = vpow.pop %v1906
    %v1908 = vmul.f32 %v1905, 1.442695
    %v1909 = vpow.pop %v1908
    %v1910 = vadd.f32 %v1907, 1.0
    %v1911 = vadd.f32 %v1909, 1.0
    %v1912 = vrcp.pop %v1910
    %v1913 = vmul.f32 1.0, %v1912
    %v1914 = vrcp.pop %v1911
    %v1915 = vmul.f32 1.0, %v1914
    %1917 = vset.pattern.permute.xlu0 64
    %1918 = vperm.xlu0 %1917, %v1913
    %v1919 = vpop.permute.xlu0 %1918
    %1922 = vset.pattern.permute.xlu0 64
    %1923 = vperm.xlu0 %1922, %v1915
    %v1924 = vpop.permute.xlu0 %1923
    %v1926 = vmul.f32 %v1919, %v1901
    %v1927 = vmul.f32 %v1924, %v1903
    %v1928 = vsub.f32 1.0, %v1913
    %v1929 = vsub.f32 1.0, %v1915
    %1931 = vset.pattern.permute.xlu0 64
    %1932 = vperm.xlu0 %1931, %v1928
    %v1933 = vpop.permute.xlu0 %1932
    %1936 = vset.pattern.permute.xlu0 64
    %1937 = vperm.xlu0 %1936, %v1929
    %v1938 = vpop.permute.xlu0 %1937
    %v1940 = vmul.f32 %v1933, %v1559
    %v1941 = vmul.f32 %v1938, %v1561
    %v1942 = vld [vmem:[%s1] sm:$0x3]
    %v1943 = vlaneseq
    %v1944 = vshrl.u32 %v1943, 7
    %v1945 = vsub.s32 0, %v1944
    %v1946 = vrot.slane %v1942, %v1945
    %1948 = vbcast.lane.b32.xlu0 %v1946, 256
    %v1949 = vpop.permute.xlu0 %1948
    %v1950 = vlaneseq
    %v1951 = vshrl.u32 %v1950, 7
    %v1952 = vsub.s32 1, %v1951
    %v1953 = vrot.slane %v1942, %v1952
    %1955 = vbcast.lane.b32.xlu0 %v1953, 256
    %v1956 = vpop.permute.xlu0 %1955
    %vm1957 = vcmp.eq.s32.totalorder %v1949, %v151
    %vm1958 = vcmp.eq.s32.totalorder %v1956, %v151
    %v1959 = vsel %vm1957, 1, 0
    %v1960 = vsel %vm1958, 1, 0
    %v1961 = vcvt.s32.f32 %v1959
    %v1962 = vcvt.s32.f32 %v1960
    %v1964 = vsel %vm1539, %v1940, 0
    %1966 = vmatprep.subr.mxu0 0.0
    %1967 = vmatpush1.msra.mxu0 0.0
    %1968 = vmatprep.subr.mxu0 0.0
    %1969 = vmatpush1.msra.mxu0 0.0
    %1970 = vmatprep.subr.mxu0 0.0
    %1971 = vmatpush1.msra.mxu0 0.0
    %1972 = vmatprep.subr.mxu0 0.0
    %1973 = vmatpush1.msra.mxu0 0.0
    %1974 = vmatprep.subr.mxu0 0.0
    %1975 = vmatpush1.msra.mxu0 0.0
    %1976 = vmatprep.subr.mxu0 0.0
    %1977 = vmatpush1.msra.mxu0 0.0
    %1978 = vmatprep.subr.mxu0 0.0
    %1979 = vmatpush1.msra.mxu0 0.0
    %1980 = vmatprep.subr.mxu0 0.0
    %1981 = vmatpush1.msra.mxu0 0.0
    %1982 = vmatprep.subr.mxu0 0.0
    %1983 = vmatpush1.msra.mxu0 0.0
    %1984 = vmatprep.subr.mxu0 0.0
    %1985 = vmatpush1.msra.mxu0 0.0
    %1986 = vmatprep.subr.mxu0 0.0
    %1987 = vmatpush1.msra.mxu0 0.0
    %1988 = vmatprep.subr.mxu0 0.0
    %1989 = vmatpush1.msra.mxu0 0.0
    %1990 = vmatprep.subr.mxu0 0.0
    %1991 = vmatpush1.msra.mxu0 0.0
    %1992 = vmatprep.subr.mxu0 0.0
    %1993 = vmatpush1.msra.mxu0 0.0
    %1994 = vmatprep.subr.mxu0 0.0
    %1995 = vmatpush1.msra.mxu0 0.0
    %1996 = vmatprep.subr.mxu0 0.0
    %1997 = vmatpush1.msra.mxu0 %v1961
    %1998 = vmatprep.subr.mxu0 0.0
    %1999 = vmatpush2.msra.mxu0 0.0
    %2000 = vmatprep.subr.mxu0 0.0
    %2001 = vmatpush2.msra.mxu0 0.0
    %2002 = vmatprep.subr.mxu0 0.0
    %2003 = vmatpush2.msra.mxu0 0.0
    %2004 = vmatprep.subr.mxu0 0.0
    %2005 = vmatpush2.msra.mxu0 0.0
    %2006 = vmatprep.subr.mxu0 0.0
    %2007 = vmatpush2.msra.mxu0 0.0
    %2008 = vmatprep.subr.mxu0 0.0
    %2009 = vmatpush2.msra.mxu0 0.0
    %2010 = vmatprep.subr.mxu0 0.0
    %2011 = vmatpush2.msra.mxu0 0.0
    %2012 = vmatprep.subr.mxu0 0.0
    %2013 = vmatpush2.msra.mxu0 0.0
    %2014 = vmatprep.subr.mxu0 0.0
    %2015 = vmatpush2.msra.mxu0 0.0
    %2016 = vmatprep.subr.mxu0 0.0
    %2017 = vmatpush2.msra.mxu0 0.0
    %2018 = vmatprep.subr.mxu0 0.0
    %2019 = vmatpush2.msra.mxu0 0.0
    %2020 = vmatprep.subr.mxu0 0.0
    %2021 = vmatpush2.msra.mxu0 0.0
    %2022 = vmatprep.subr.mxu0 0.0
    %2023 = vmatpush2.msra.mxu0 0.0
    %2024 = vmatprep.subr.mxu0 0.0
    %2025 = vmatpush2.msra.mxu0 0.0
    %2026 = vmatprep.subr.mxu0 0.0
    %2027 = vmatpush2.msra.mxu0 0.0
    %2028 = vmatprep.subr.mxu0 0.0
    %2029 = vmatpush2.msra.mxu0 0.0
    %2030 = vmatprep.mubr.f32.mxu0 0.0
    %2031 = vmatmul.mubr.f32.gmra.mxu0 %v1964
    %v2032 = vpop.f32.mrf.mxu0
    %v2033 = vadd.f32 0.0, %v2032
    %v2034 = vpop.f32.mrf.mxu0
    %2035 = vdwg.mxu0
    %v2037 = vsel %vm1539, %v1941, 0
    %2039 = vmatprep.subr.mxu0 0.0
    %2040 = vmatpush1.msra.mxu0 0.0
    %2041 = vmatprep.subr.mxu0 0.0
    %2042 = vmatpush1.msra.mxu0 0.0
    %2043 = vmatprep.subr.mxu0 0.0
    %2044 = vmatpush1.msra.mxu0 0.0
    %2045 = vmatprep.subr.mxu0 0.0
    %2046 = vmatpush1.msra.mxu0 0.0
    %2047 = vmatprep.subr.mxu0 0.0
    %2048 = vmatpush1.msra.mxu0 0.0
    %2049 = vmatprep.subr.mxu0 0.0
    %2050 = vmatpush1.msra.mxu0 0.0
    %2051 = vmatprep.subr.mxu0 0.0
    %2052 = vmatpush1.msra.mxu0 0.0
    %2053 = vmatprep.subr.mxu0 0.0
    %2054 = vmatpush1.msra.mxu0 0.0
    %2055 = vmatprep.subr.mxu0 0.0
    %2056 = vmatpush1.msra.mxu0 0.0
    %2057 = vmatprep.subr.mxu0 0.0
    %2058 = vmatpush1.msra.mxu0 0.0
    %2059 = vmatprep.subr.mxu0 0.0
    %2060 = vmatpush1.msra.mxu0 0.0
    %2061 = vmatprep.subr.mxu0 0.0
    %2062 = vmatpush1.msra.mxu0 0.0
    %2063 = vmatprep.subr.mxu0 0.0
    %2064 = vmatpush1.msra.mxu0 0.0
    %2065 = vmatprep.subr.mxu0 0.0
    %2066 = vmatpush1.msra.mxu0 0.0
    %2067 = vmatprep.subr.mxu0 0.0
    %2068 = vmatpush1.msra.mxu0 0.0
    %2069 = vmatprep.subr.mxu0 0.0
    %2070 = vmatpush1.msra.mxu0 %v1962
    %2071 = vmatprep.subr.mxu0 0.0
    %2072 = vmatpush2.msra.mxu0 0.0
    %2073 = vmatprep.subr.mxu0 0.0
    %2074 = vmatpush2.msra.mxu0 0.0
    %2075 = vmatprep.subr.mxu0 0.0
    %2076 = vmatpush2.msra.mxu0 0.0
    %2077 = vmatprep.subr.mxu0 0.0
    %2078 = vmatpush2.msra.mxu0 0.0
    %2079 = vmatprep.subr.mxu0 0.0
    %2080 = vmatpush2.msra.mxu0 0.0
    %2081 = vmatprep.subr.mxu0 0.0
    %2082 = vmatpush2.msra.mxu0 0.0
    %2083 = vmatprep.subr.mxu0 0.0
    %2084 = vmatpush2.msra.mxu0 0.0
    %2085 = vmatprep.subr.mxu0 0.0
    %2086 = vmatpush2.msra.mxu0 0.0
    %2087 = vmatprep.subr.mxu0 0.0
    %2088 = vmatpush2.msra.mxu0 0.0
    %2089 = vmatprep.subr.mxu0 0.0
    %2090 = vmatpush2.msra.mxu0 0.0
    %2091 = vmatprep.subr.mxu0 0.0
    %2092 = vmatpush2.msra.mxu0 0.0
    %2093 = vmatprep.subr.mxu0 0.0
    %2094 = vmatpush2.msra.mxu0 0.0
    %2095 = vmatprep.subr.mxu0 0.0
    %2096 = vmatpush2.msra.mxu0 0.0
    %2097 = vmatprep.subr.mxu0 0.0
    %2098 = vmatpush2.msra.mxu0 0.0
    %2099 = vmatprep.subr.mxu0 0.0
    %2100 = vmatpush2.msra.mxu0 0.0
    %2101 = vmatprep.subr.mxu0 0.0
    %2102 = vmatpush2.msra.mxu0 0.0
    %2103 = vmatprep.mubr.f32.mxu0 0.0
    %2104 = vmatmul.mubr.f32.gmra.mxu0 %v2037
    %v2105 = vpop.f32.mrf.mxu0
    %v2106 = vadd.f32 0.0, %v2105
    %v2107 = vpop.f32.mrf.mxu0
    %2108 = vdwg.mxu0
    %v2109 = vadd.f32 %v1926, %v2033
    %v2110 = vadd.f32 %v1927, %v2106
    %v2111 = vlog2.pop %v2109
    %v2112 = vmul.f32 %v2111, 0.6931472
    %v2113 = vlog2.pop %v2110
    %v2114 = vmul.f32 %v2113, 0.6931472
    %2115 = vst.msk [vmem:[%s7] sm:$0xff] %vm168, %v2112
    %2116 = vst.msk [vmem:[%s7 + $0x8] sm:$0xff] %vm168, %v2114
    %2117 = vst.msk [vmem:[#allocation2] sm:$0xff] %vm1539, %v1559
    %2118 = vst.msk [vmem:[#allocation2 + $0x8] sm:$0xff] %vm1539, %v1561
    %2119 = vst.msk [vmem:[#allocation4] sm:$0xff] %vm254, %v1795
    %2120 = vst.msk [vmem:[#allocation4 + $0x8] sm:$0xff] %vm254, %v1796
    // Predicated region
    $region30: #{_device_forward.1} parent=1 // pred_check
      _
    $region31: #{_device_forward.1} parent=1 // pred_check_branch
      %2122 = sbr.rel (0) target = $region33
    $region32: #{_device_forward.1} parent=1 // pred_region
      _
    $region33: #{_device_forward.1} parent=1 // pred_fallthru
      _
    // Predicated region
    $region34: #{_device_forward.1} parent=1 // pred_check
      _
    $region35: #{_device_forward.1} parent=1 // pred_check_branch
      %2124 = sbr.rel (0) target = $region37
    $region36: #{_device_forward.1} parent=1 // pred_region
      %s2126 = ssub.s32 256, 256
      %2127 = vsyncadd [#allocation3], %s2126
      %s2128 = sshll.u32 [#allocation2], 4
      %s2129 = int_to_ptr.vmem [resolvable:$true] %s2128
      %2134 = dma.vmem_to_hbm [thread:$0]  %s2129, 256, %s8, [#allocation3], 128, 128, 8
    $region37: #{_device_forward.1} parent=1 // pred_fallthru
      _
    // Predicated region
    $region38: #{_device_forward.1} parent=1 // pred_check
      _
    $region39: #{_device_forward.1} parent=1 // pred_check_branch
      %2136 = sbr.rel (0) target = $region41
    $region40: #{_device_forward.1} parent=1 // pred_region
      %s2138 = ssub.s32 256, 256
      %2139 = vsyncadd [#allocation5], %s2138
      %s2140 = sshll.u32 [#allocation4], 4
      %s2141 = int_to_ptr.vmem [resolvable:$true] %s2140
      %2146 = dma.vmem_to_hbm [thread:$0]  %s2141, 256, %s9, [#allocation5], 128, 128, 8
    $region41: #{_device_forward.1} parent=1 // pred_fallthru
      _
    // Predicated region
    $region42: #{_device_forward.1} parent=1 // pred_check
      _
    $region43: #{_device_forward.1} parent=1 // pred_check_branch
      %2148 = sbr.rel (0) target = $region45
    $region44: #{_device_forward.1} parent=1 // pred_region
      %s2150 = ssub.s32 32, 32
      %2151 = vsyncadd [#allocation5], %s2150
      %s2153 = sshll.u32 [#allocation6], 4
      %s2154 = int_to_ptr.vmem [resolvable:$true] %s2153
      %2156 = dma.vmem_to_hbm [thread:$0]  %s2154, 32, %s10, [#allocation5]
    $region45: #{_device_forward.1} parent=1 // pred_fallthru
      _
    // Predicated region
    $region46: #{_device_forward.1} parent=1 // pred_check
      _
    $region47: #{_device_forward.1} parent=1 // pred_check_branch
      %2158 = sbr.rel (0) target = $region49
    $region48: #{_device_forward.1} parent=1 // pred_region
      %s2160 = ssub.s32 32, 32
      %2161 = vsyncadd [#allocation8], %s2160
      %s2163 = sshll.u32 [#allocation7], 4
      %s2164 = int_to_ptr.vmem [resolvable:$true] %s2163
      %2166 = dma.vmem_to_hbm [thread:$0]  %s2164, 32, %s11, [#allocation8]
    $region49: #{_device_forward.1} parent=1 // pred_fallthru
      _
    // Predicated region
    $region50: #{_device_forward.1} parent=1 // pred_check
      _
    $region51: #{_device_forward.1} parent=1 // pred_check_branch
      %2168 = sbr.rel (0) target = $region53
    $region52: #{_device_forward.1} parent=1 // pred_region
      _
    $region53: #{_device_forward.1} parent=1 // pred_fallthru
      _
    // Predicated region
    $region54: #{_device_forward.1} parent=1 // pred_check
      _
    $region55: #{_device_forward.1} parent=1 // pred_check_branch
      %2170 = sbr.rel (0) target = $region57
    $region56: #{_device_forward.1} parent=1 // pred_region
      %2171 = dma.done [#allocation3], 256
    $region57: #{_device_forward.1} parent=1 // pred_fallthru
      _
    // Predicated region
    $region58: #{_device_forward.1} parent=1 // pred_check
      _
    $region59: #{_device_forward.1} parent=1 // pred_check_branch
      %2173 = sbr.rel (0) target = $region61
    $region60: #{_device_forward.1} parent=1 // pred_region
      %2174 = dma.done [#allocation5], 256
    $region61: #{_device_forward.1} parent=1 // pred_fallthru
      _
    // Predicated region
    $region62: #{_device_forward.1} parent=1 // pred_check
      _
    $region63: #{_device_forward.1} parent=1 // pred_check_branch
      %2176 = sbr.rel (0) target = $region65
    $region64: #{_device_forward.1} parent=1 // pred_region
      %2177 = dma.done [#allocation5], 32
    $region65: #{_device_forward.1} parent=1 // pred_fallthru
      _
    // Predicated region
    $region66: #{_device_forward.1} parent=1 // pred_check
      _
    $region67: #{_device_forward.1} parent=1 // pred_check_branch
      %2179 = sbr.rel (0) target = $region69
    $region68: #{_device_forward.1} parent=1 // pred_region
      %2180 = dma.done [#allocation8], 32
    $region69: #{_device_forward.1} parent=1 // pred_fallthru
      _
    %2181 = vsyncpa [#allocation3], 1
    %2182 = vsyncpa [#allocation5], 1
    %2183 = vsyncpa [#allocation8], 1

</llo_original>
